<compile_context>
chip_gen: v5e
topology: v5e:2x2
jax: 0.10.0
libtpu: 0.0.40
codegen_flags: <defaults>
</compile_context>

<pallas_src>
import functools

import jax
import jax.numpy as jnp
from jax.experimental import pallas as pl
from jax.experimental.pallas import tpu as pltpu


def _round_up(n, m):
    return ((n + m - 1) // m) * m


def _lstm_kernel(x_ref, wih_ref, whh_ref, b_ref, wfc_ref, bfc_ref, out_ref,
                 *, seq_len, batch):
    """Single-invocation LSTM forward + final FC.

    x_ref   : (T*B, I_pad)      time-major, row = t*B + b
    wih_ref : (I_pad, 4*GP)     per-gate blocks, each padded to GP=128 lanes
    whh_ref : (GP,   4*GP)
    b_ref   : (1,    4*GP)      b_ih + b_hh (padded)
    wfc_ref : (GP,   OUT_pad)
    bfc_ref : (1,    OUT_pad)
    out_ref : (B,    OUT_pad)
    """
    gp = whh_ref.shape[0]                      # padded per-gate width (>=128)

    # Hoist weight / bias loads out of the unrolled time loop.
    wih = wih_ref[...]
    whh = whh_ref[...]
    bias = b_ref[...]

    # Input projection for ALL timesteps in one matmul (independent of the
    # recurrence -> off the serial critical path).  Single bias broadcast.
    gates_x = (jnp.dot(x_ref[...], wih, preferred_element_type=jnp.float32)
               + bias)                          # (T*B, 4*GP)

    # Recurrence: h/c carried as values (vregs).  Static unroll; all slices
    # are lane/sublane aligned (gate offsets are multiples of 128, row offsets
    # are multiples of the batch).
    h = jnp.zeros((batch, gp), jnp.float32)
    c = jnp.zeros((batch, gp), jnp.float32)
    for t in range(seq_len):
        g = gates_x[t * batch:(t + 1) * batch, :] + jnp.dot(
            h, whh, preferred_element_type=jnp.float32)          # (B, 4*GP)
        i_g = jax.nn.sigmoid(g[:, 0 * gp:1 * gp])
        f_g = jax.nn.sigmoid(g[:, 1 * gp:2 * gp])
        g_g = jnp.tanh(g[:, 2 * gp:3 * gp])
        o_g = jax.nn.sigmoid(g[:, 3 * gp:4 * gp])
        # Padding lanes stay exactly 0: bias/weight pads are 0 -> g pad = 0,
        # tanh(0) = 0 -> c pad stays 0, h pad = o * tanh(0) = 0.
        c = f_g * c + i_g * g_g
        h = o_g * jnp.tanh(c)

    # Final FC on h_T, written as a lane-dense (B, 128) slab (unmasked vst).
    out_ref[...] = (jnp.dot(h, wfc_ref[...], preferred_element_type=jnp.float32)
                    + bfc_ref[...]).astype(out_ref.dtype)


def lstm_model_forward(x, w_ih, w_hh, b_ih, b_hh, w_fc, b_fc):
    """x: (B, T, I) float32 (batch_first, as in PyTorch). Returns (B, 7)."""
    B, T, I = x.shape
    H = w_hh.shape[1]          # w_hh: (4H, H) PyTorch convention
    out_dim = w_fc.shape[0]    # w_fc: (7, H)

    GP = _round_up(H, 128)     # per-gate lane-aligned width
    I_PAD = _round_up(I, 128)
    OUT_PAD = _round_up(out_dim, 128)

    f32 = jnp.float32

    # --- wrapper-side layout plumbing (all one-time, outside the kernel) ----
    # time-major, flattened rows ordered (t, b); features padded to I_PAD
    x_tm = jnp.transpose(x.astype(f32), (1, 0, 2)).reshape(T * B, I)
    x_pad = jnp.zeros((T * B, I_PAD), f32).at[:, :I].set(x_tm)

    # per-gate padded, pre-transposed weights
    wih_pad = (jnp.zeros((I_PAD, 4, GP), f32)
               .at[:I, :, :H].set(w_ih.T.reshape(I, 4, H))
               .reshape(I_PAD, 4 * GP))
    whh_pad = (jnp.zeros((GP, 4, GP), f32)
               .at[:H, :, :H].set(w_hh.T.reshape(H, 4, H))
               .reshape(GP, 4 * GP))
    bias_pad = (jnp.zeros((1, 4, GP), f32)
                .at[0, :, :H].set((b_ih + b_hh).reshape(4, H))
                .reshape(1, 4 * GP))

    wfc_pad = jnp.zeros((GP, OUT_PAD), f32).at[:H, :out_dim].set(w_fc.T)
    bfc_pad = jnp.zeros((1, OUT_PAD), f32).at[0, :out_dim].set(b_fc)

    kernel = functools.partial(_lstm_kernel, seq_len=T, batch=B)

    vmem = pl.BlockSpec(memory_space=pltpu.MemorySpace.VMEM)  # whole array resident
    out_padded = pl.pallas_call(
        kernel,
        out_shape=jax.ShapeDtypeStruct((B, OUT_PAD), f32),
        in_specs=[vmem] * 6,
        out_specs=vmem,
    )(x_pad, wih_pad, whh_pad, bias_pad, wfc_pad, bfc_pad)

    return out_padded[:, :out_dim]


def _reference_forward(x, w_ih, w_hh, b_ih, b_hh, w_fc, b_fc):
    """Pure-JAX reference matching torch.nn.LSTM + nn.Linear semantics."""
    B, T, I = x.shape
    H = w_hh.shape[1]
    h = jnp.zeros((B, H), jnp.float32)
    c = jnp.zeros((B, H), jnp.float32)
    for t in range(T):
        gates = x[:, t, :] @ w_ih.T + h @ w_hh.T + b_ih + b_hh
        i_g = jax.nn.sigmoid(gates[:, 0 * H:1 * H])
        f_g = jax.nn.sigmoid(gates[:, 1 * H:2 * H])
        g_g = jnp.tanh(gates[:, 2 * H:3 * H])
        o_g = jax.nn.sigmoid(gates[:, 3 * H:4 * H])
        c = f_g * c + i_g * g_g
        h = o_g * jnp.tanh(c)
    return h @ w_fc.T + b_fc


if __name__ == "__main__":
    # Small, deterministic shapes consistent with the module's forward.
    # hidden_size matches the module default (64); B=8 keeps per-step row
    # slices sublane-tile aligned.
    B, T, I, H, OUT = 8, 8, 16, 64, 7

    key = jax.random.PRNGKey(0)
    kx, k1, k2, k3, k4, k5, k6 = jax.random.split(key, 7)
    scale = 1.0 / jnp.sqrt(H)

    x = jax.random.normal(kx, (B, T, I), dtype=jnp.float32)
    w_ih = jax.random.uniform(k1, (4 * H, I), jnp.float32, -scale, scale)
    w_hh = jax.random.uniform(k2, (4 * H, H), jnp.float32, -scale, scale)
    b_ih = jax.random.uniform(k3, (4 * H,), jnp.float32, -scale, scale)
    b_hh = jax.random.uniform(k4, (4 * H,), jnp.float32, -scale, scale)
    w_fc = jax.random.uniform(k5, (OUT, H), jnp.float32, -scale, scale)
    b_fc = jax.random.uniform(k6, (OUT,), jnp.float32, -scale, scale)

    out = lstm_model_forward(x, w_ih, w_hh, b_ih, b_hh, w_fc, b_fc)
    out = jax.block_until_ready(out)

    ref = _reference_forward(x, w_ih, w_hh, b_ih, b_hh, w_fc, b_fc)
    assert out.shape == (B, OUT), out.shape
    assert jnp.allclose(out, ref, atol=2e-5, rtol=2e-5), (
        "mismatch vs reference: max abs err "
        f"{jnp.max(jnp.abs(out - ref))}")

    print("KERNEL_OK")
</pallas_src>

<mosaic_0001>
module attributes {stable_mosaic.version = 11 : i64} {
  func.func @_lstm_kernel(%arg0: memref<64x128xf32, #tpu.memory_space<vmem>>, %arg1: memref<128x512xf32, #tpu.memory_space<vmem>>, %arg2: memref<128x512xf32, #tpu.memory_space<vmem>>, %arg3: memref<1x512xf32, #tpu.memory_space<vmem>>, %arg4: memref<128x128xf32, #tpu.memory_space<vmem>>, %arg5: memref<1x128xf32, #tpu.memory_space<vmem>>, %arg6: memref<8x128xf32, #tpu.memory_space<vmem>>) attributes {dimension_semantics = [], scalar_prefetch = 0 : i64, scratch_operands = 0 : i64, tpu.core_type = #tpu.core_type<tc>} {
    %c0 = arith.constant 0 : index
    %c0_0 = arith.constant 0 : index
    %0 = vector.load %arg1[%c0, %c0_0] : memref<128x512xf32, #tpu.memory_space<vmem>>, vector<128x512xf32>
    %c0_1 = arith.constant 0 : index
    %c0_2 = arith.constant 0 : index
    %1 = vector.load %arg2[%c0_1, %c0_2] : memref<128x512xf32, #tpu.memory_space<vmem>>, vector<128x512xf32>
    %c0_3 = arith.constant 0 : index
    %c0_4 = arith.constant 0 : index
    %2 = vector.load %arg3[%c0_3, %c0_4] : memref<1x512xf32, #tpu.memory_space<vmem>>, vector<1x512xf32>
    %c0_5 = arith.constant 0 : index
    %c0_6 = arith.constant 0 : index
    %3 = vector.load %arg0[%c0_5, %c0_6] : memref<64x128xf32, #tpu.memory_space<vmem>>, vector<64x128xf32>
    %cst = arith.constant dense<0.000000e+00> : vector<64x512xf32>
    %4 = tpu.matmul %3, %0, %cst {dimension_numbers = #tpu.dot_dimension_numbers<[1], [0], [0], [1], [0, 0, 1, 1], [], []>} : vector<64x128xf32>, vector<128x512xf32>, vector<64x512xf32> -> vector<64x512xf32>
    %5 = vector.broadcast %2 : vector<1x512xf32> to vector<64x512xf32>
    %6 = arith.addf %4, %5 : vector<64x512xf32>
    %cst_7 = arith.constant 0.000000e+00 : f32
    %7 = vector.broadcast %cst_7 : f32 to vector<8x128xf32>
    %cst_8 = arith.constant 0.000000e+00 : f32
    %8 = vector.broadcast %cst_8 : f32 to vector<8x128xf32>
    %9 = vector.extract_strided_slice %6 {offsets = [0, 0], sizes = [8, 512], strides = [1, 1]} : vector<64x512xf32> to vector<8x512xf32>
    %cst_9 = arith.constant dense<0.000000e+00> : vector<8x512xf32>
    %10 = tpu.matmul %7, %1, %cst_9 {dimension_numbers = #tpu.dot_dimension_numbers<[1], [0], [0], [1], [0, 0, 1, 1], [], []>} : vector<8x128xf32>, vector<128x512xf32>, vector<8x512xf32> -> vector<8x512xf32>
    %11 = arith.addf %9, %10 : vector<8x512xf32>
    %12 = vector.extract_strided_slice %11 {offsets = [0, 0], sizes = [8, 128], strides = [1, 1]} : vector<8x512xf32> to vector<8x128xf32>
    %13 = arith.negf %12 : vector<8x128xf32>
    %14 = math.exp %13 : vector<8x128xf32>
    %cst_10 = arith.constant 1.000000e+00 : f32
    %15 = vector.broadcast %cst_10 : f32 to vector<8x128xf32>
    %16 = arith.addf %15, %14 : vector<8x128xf32>
    %17 = arith.divf %15, %16 : vector<8x128xf32>
    %18 = vector.extract_strided_slice %11 {offsets = [0, 128], sizes = [8, 128], strides = [1, 1]} : vector<8x512xf32> to vector<8x128xf32>
    %19 = arith.negf %18 : vector<8x128xf32>
    %20 = math.exp %19 : vector<8x128xf32>
    %cst_11 = arith.constant 1.000000e+00 : f32
    %21 = vector.broadcast %cst_11 : f32 to vector<8x128xf32>
    %22 = arith.addf %21, %20 : vector<8x128xf32>
    %23 = arith.divf %21, %22 : vector<8x128xf32>
    %24 = vector.extract_strided_slice %11 {offsets = [0, 256], sizes = [8, 128], strides = [1, 1]} : vector<8x512xf32> to vector<8x128xf32>
    %25 = math.tanh %24 : vector<8x128xf32>
    %26 = vector.extract_strided_slice %11 {offsets = [0, 384], sizes = [8, 128], strides = [1, 1]} : vector<8x512xf32> to vector<8x128xf32>
    %27 = arith.negf %26 : vector<8x128xf32>
    %28 = math.exp %27 : vector<8x128xf32>
    %cst_12 = arith.constant 1.000000e+00 : f32
    %29 = vector.broadcast %cst_12 : f32 to vector<8x128xf32>
    %30 = arith.addf %29, %28 : vector<8x128xf32>
    %31 = arith.divf %29, %30 : vector<8x128xf32>
    %32 = arith.mulf %23, %8 : vector<8x128xf32>
    %33 = arith.mulf %17, %25 : vector<8x128xf32>
    %34 = arith.addf %32, %33 : vector<8x128xf32>
    %35 = math.tanh %34 : vector<8x128xf32>
    %36 = arith.mulf %31, %35 : vector<8x128xf32>
    %37 = vector.extract_strided_slice %6 {offsets = [8, 0], sizes = [8, 512], strides = [1, 1]} : vector<64x512xf32> to vector<8x512xf32>
    %cst_13 = arith.constant dense<0.000000e+00> : vector<8x512xf32>
    %38 = tpu.matmul %36, %1, %cst_13 {dimension_numbers = #tpu.dot_dimension_numbers<[1], [0], [0], [1], [0, 0, 1, 1], [], []>} : vector<8x128xf32>, vector<128x512xf32>, vector<8x512xf32> -> vector<8x512xf32>
    %39 = arith.addf %37, %38 : vector<8x512xf32>
    %40 = vector.extract_strided_slice %39 {offsets = [0, 0], sizes = [8, 128], strides = [1, 1]} : vector<8x512xf32> to vector<8x128xf32>
    %41 = arith.negf %40 : vector<8x128xf32>
    %42 = math.exp %41 : vector<8x128xf32>
    %cst_14 = arith.constant 1.000000e+00 : f32
    %43 = vector.broadcast %cst_14 : f32 to vector<8x128xf32>
    %44 = arith.addf %43, %42 : vector<8x128xf32>
    %45 = arith.divf %43, %44 : vector<8x128xf32>
    %46 = vector.extract_strided_slice %39 {offsets = [0, 128], sizes = [8, 128], strides = [1, 1]} : vector<8x512xf32> to vector<8x128xf32>
    %47 = arith.negf %46 : vector<8x128xf32>
    %48 = math.exp %47 : vector<8x128xf32>
    %cst_15 = arith.constant 1.000000e+00 : f32
    %49 = vector.broadcast %cst_15 : f32 to vector<8x128xf32>
    %50 = arith.addf %49, %48 : vector<8x128xf32>
    %51 = arith.divf %49, %50 : vector<8x128xf32>
    %52 = vector.extract_strided_slice %39 {offsets = [0, 256], sizes = [8, 128], strides = [1, 1]} : vector<8x512xf32> to vector<8x128xf32>
    %53 = math.tanh %52 : vector<8x128xf32>
    %54 = vector.extract_strided_slice %39 {offsets = [0, 384], sizes = [8, 128], strides = [1, 1]} : vector<8x512xf32> to vector<8x128xf32>
    %55 = arith.negf %54 : vector<8x128xf32>
    %56 = math.exp %55 : vector<8x128xf32>
    %cst_16 = arith.constant 1.000000e+00 : f32
    %57 = vector.broadcast %cst_16 : f32 to vector<8x128xf32>
    %58 = arith.addf %57, %56 : vector<8x128xf32>
    %59 = arith.divf %57, %58 : vector<8x128xf32>
    %60 = arith.mulf %51, %34 : vector<8x128xf32>
    %61 = arith.mulf %45, %53 : vector<8x128xf32>
    %62 = arith.addf %60, %61 : vector<8x128xf32>
    %63 = math.tanh %62 : vector<8x128xf32>
    %64 = arith.mulf %59, %63 : vector<8x128xf32>
    %65 = vector.extract_strided_slice %6 {offsets = [16, 0], sizes = [8, 512], strides = [1, 1]} : vector<64x512xf32> to vector<8x512xf32>
    %cst_17 = arith.constant dense<0.000000e+00> : vector<8x512xf32>
    %66 = tpu.matmul %64, %1, %cst_17 {dimension_numbers = #tpu.dot_dimension_numbers<[1], [0], [0], [1], [0, 0, 1, 1], [], []>} : vector<8x128xf32>, vector<128x512xf32>, vector<8x512xf32> -> vector<8x512xf32>
    %67 = arith.addf %65, %66 : vector<8x512xf32>
    %68 = vector.extract_strided_slice %67 {offsets = [0, 0], sizes = [8, 128], strides = [1, 1]} : vector<8x512xf32> to vector<8x128xf32>
    %69 = arith.negf %68 : vector<8x128xf32>
    %70 = math.exp %69 : vector<8x128xf32>
    %cst_18 = arith.constant 1.000000e+00 : f32
    %71 = vector.broadcast %cst_18 : f32 to vector<8x128xf32>
    %72 = arith.addf %71, %70 : vector<8x128xf32>
    %73 = arith.divf %71, %72 : vector<8x128xf32>
    %74 = vector.extract_strided_slice %67 {offsets = [0, 128], sizes = [8, 128], strides = [1, 1]} : vector<8x512xf32> to vector<8x128xf32>
    %75 = arith.negf %74 : vector<8x128xf32>
    %76 = math.exp %75 : vector<8x128xf32>
    %cst_19 = arith.constant 1.000000e+00 : f32
    %77 = vector.broadcast %cst_19 : f32 to vector<8x128xf32>
    %78 = arith.addf %77, %76 : vector<8x128xf32>
    %79 = arith.divf %77, %78 : vector<8x128xf32>
    %80 = vector.extract_strided_slice %67 {offsets = [0, 256], sizes = [8, 128], strides = [1, 1]} : vector<8x512xf32> to vector<8x128xf32>
    %81 = math.tanh %80 : vector<8x128xf32>
    %82 = vector.extract_strided_slice %67 {offsets = [0, 384], sizes = [8, 128], strides = [1, 1]} : vector<8x512xf32> to vector<8x128xf32>
    %83 = arith.negf %82 : vector<8x128xf32>
    %84 = math.exp %83 : vector<8x128xf32>
    %cst_20 = arith.constant 1.000000e+00 : f32
    %85 = vector.broadcast %cst_20 : f32 to vector<8x128xf32>
    %86 = arith.addf %85, %84 : vector<8x128xf32>
    %87 = arith.divf %85, %86 : vector<8x128xf32>
    %88 = arith.mulf %79, %62 : vector<8x128xf32>
    %89 = arith.mulf %73, %81 : vector<8x128xf32>
    %90 = arith.addf %88, %89 : vector<8x128xf32>
    %91 = math.tanh %90 : vector<8x128xf32>
    %92 = arith.mulf %87, %91 : vector<8x128xf32>
    %93 = vector.extract_strided_slice %6 {offsets = [24, 0], sizes = [8, 512], strides = [1, 1]} : vector<64x512xf32> to vector<8x512xf32>
    %cst_21 = arith.constant dense<0.000000e+00> : vector<8x512xf32>
    %94 = tpu.matmul %92, %1, %cst_21 {dimension_numbers = #tpu.dot_dimension_numbers<[1], [0], [0], [1], [0, 0, 1, 1], [], []>} : vector<8x128xf32>, vector<128x512xf32>, vector<8x512xf32> -> vector<8x512xf32>
    %95 = arith.addf %93, %94 : vector<8x512xf32>
    %96 = vector.extract_strided_slice %95 {offsets = [0, 0], sizes = [8, 128], strides = [1, 1]} : vector<8x512xf32> to vector<8x128xf32>
    %97 = arith.negf %96 : vector<8x128xf32>
    %98 = math.exp %97 : vector<8x128xf32>
    %cst_22 = arith.constant 1.000000e+00 : f32
    %99 = vector.broadcast %cst_22 : f32 to vector<8x128xf32>
    %100 = arith.addf %99, %98 : vector<8x128xf32>
    %101 = arith.divf %99, %100 : vector<8x128xf32>
    %102 = vector.extract_strided_slice %95 {offsets = [0, 128], sizes = [8, 128], strides = [1, 1]} : vector<8x512xf32> to vector<8x128xf32>
    %103 = arith.negf %102 : vector<8x128xf32>
    %104 = math.exp %103 : vector<8x128xf32>
    %cst_23 = arith.constant 1.000000e+00 : f32
    %105 = vector.broadcast %cst_23 : f32 to vector<8x128xf32>
    %106 = arith.addf %105, %104 : vector<8x128xf32>
    %107 = arith.divf %105, %106 : vector<8x128xf32>
    %108 = vector.extract_strided_slice %95 {offsets = [0, 256], sizes = [8, 128], strides = [1, 1]} : vector<8x512xf32> to vector<8x128xf32>
    %109 = math.tanh %108 : vector<8x128xf32>
    %110 = vector.extract_strided_slice %95 {offsets = [0, 384], sizes = [8, 128], strides = [1, 1]} : vector<8x512xf32> to vector<8x128xf32>
    %111 = arith.negf %110 : vector<8x128xf32>
    %112 = math.exp %111 : vector<8x128xf32>
    %cst_24 = arith.constant 1.000000e+00 : f32
    %113 = vector.broadcast %cst_24 : f32 to vector<8x128xf32>
    %114 = arith.addf %113, %112 : vector<8x128xf32>
    %115 = arith.divf %113, %114 : vector<8x128xf32>
    %116 = arith.mulf %107, %90 : vector<8x128xf32>
    %117 = arith.mulf %101, %109 : vector<8x128xf32>
    %118 = arith.addf %116, %117 : vector<8x128xf32>
    %119 = math.tanh %118 : vector<8x128xf32>
    %120 = arith.mulf %115, %119 : vector<8x128xf32>
    %121 = vector.extract_strided_slice %6 {offsets = [32, 0], sizes = [8, 512], strides = [1, 1]} : vector<64x512xf32> to vector<8x512xf32>
    %cst_25 = arith.constant dense<0.000000e+00> : vector<8x512xf32>
    %122 = tpu.matmul %120, %1, %cst_25 {dimension_numbers = #tpu.dot_dimension_numbers<[1], [0], [0], [1], [0, 0, 1, 1], [], []>} : vector<8x128xf32>, vector<128x512xf32>, vector<8x512xf32> -> vector<8x512xf32>
    %123 = arith.addf %121, %122 : vector<8x512xf32>
    %124 = vector.extract_strided_slice %123 {offsets = [0, 0], sizes = [8, 128], strides = [1, 1]} : vector<8x512xf32> to vector<8x128xf32>
    %125 = arith.negf %124 : vector<8x128xf32>
    %126 = math.exp %125 : vector<8x128xf32>
    %cst_26 = arith.constant 1.000000e+00 : f32
    %127 = vector.broadcast %cst_26 : f32 to vector<8x128xf32>
    %128 = arith.addf %127, %126 : vector<8x128xf32>
    %129 = arith.divf %127, %128 : vector<8x128xf32>
    %130 = vector.extract_strided_slice %123 {offsets = [0, 128], sizes = [8, 128], strides = [1, 1]} : vector<8x512xf32> to vector<8x128xf32>
    %131 = arith.negf %130 : vector<8x128xf32>
    %132 = math.exp %131 : vector<8x128xf32>
    %cst_27 = arith.constant 1.000000e+00 : f32
    %133 = vector.broadcast %cst_27 : f32 to vector<8x128xf32>
    %134 = arith.addf %133, %132 : vector<8x128xf32>
    %135 = arith.divf %133, %134 : vector<8x128xf32>
    %136 = vector.extract_strided_slice %123 {offsets = [0, 256], sizes = [8, 128], strides = [1, 1]} : vector<8x512xf32> to vector<8x128xf32>
    %137 = math.tanh %136 : vector<8x128xf32>
    %138 = vector.extract_strided_slice %123 {offsets = [0, 384], sizes = [8, 128], strides = [1, 1]} : vector<8x512xf32> to vector<8x128xf32>
    %139 = arith.negf %138 : vector<8x128xf32>
    %140 = math.exp %139 : vector<8x128xf32>
    %cst_28 = arith.constant 1.000000e+00 : f32
    %141 = vector.broadcast %cst_28 : f32 to vector<8x128xf32>
    %142 = arith.addf %141, %140 : vector<8x128xf32>
    %143 = arith.divf %141, %142 : vector<8x128xf32>
    %144 = arith.mulf %135, %118 : vector<8x128xf32>
    %145 = arith.mulf %129, %137 : vector<8x128xf32>
    %146 = arith.addf %144, %145 : vector<8x128xf32>
    %147 = math.tanh %146 : vector<8x128xf32>
    %148 = arith.mulf %143, %147 : vector<8x128xf32>
    %149 = vector.extract_strided_slice %6 {offsets = [40, 0], sizes = [8, 512], strides = [1, 1]} : vector<64x512xf32> to vector<8x512xf32>
    %cst_29 = arith.constant dense<0.000000e+00> : vector<8x512xf32>
    %150 = tpu.matmul %148, %1, %cst_29 {dimension_numbers = #tpu.dot_dimension_numbers<[1], [0], [0], [1], [0, 0, 1, 1], [], []>} : vector<8x128xf32>, vector<128x512xf32>, vector<8x512xf32> -> vector<8x512xf32>
    %151 = arith.addf %149, %150 : vector<8x512xf32>
    %152 = vector.extract_strided_slice %151 {offsets = [0, 0], sizes = [8, 128], strides = [1, 1]} : vector<8x512xf32> to vector<8x128xf32>
    %153 = arith.negf %152 : vector<8x128xf32>
    %154 = math.exp %153 : vector<8x128xf32>
    %cst_30 = arith.constant 1.000000e+00 : f32
    %155 = vector.broadcast %cst_30 : f32 to vector<8x128xf32>
    %156 = arith.addf %155, %154 : vector<8x128xf32>
    %157 = arith.divf %155, %156 : vector<8x128xf32>
    %158 = vector.extract_strided_slice %151 {offsets = [0, 128], sizes = [8, 128], strides = [1, 1]} : vector<8x512xf32> to vector<8x128xf32>
    %159 = arith.negf %158 : vector<8x128xf32>
    %160 = math.exp %159 : vector<8x128xf32>
    %cst_31 = arith.constant 1.000000e+00 : f32
    %161 = vector.broadcast %cst_31 : f32 to vector<8x128xf32>
    %162 = arith.addf %161, %160 : vector<8x128xf32>
    %163 = arith.divf %161, %162 : vector<8x128xf32>
    %164 = vector.extract_strided_slice %151 {offsets = [0, 256], sizes = [8, 128], strides = [1, 1]} : vector<8x512xf32> to vector<8x128xf32>
    %165 = math.tanh %164 : vector<8x128xf32>
    %166 = vector.extract_strided_slice %151 {offsets = [0, 384], sizes = [8, 128], strides = [1, 1]} : vector<8x512xf32> to vector<8x128xf32>
    %167 = arith.negf %166 : vector<8x128xf32>
    %168 = math.exp %167 : vector<8x128xf32>
    %cst_32 = arith.constant 1.000000e+00 : f32
    %169 = vector.broadcast %cst_32 : f32 to vector<8x128xf32>
    %170 = arith.addf %169, %168 : vector<8x128xf32>
    %171 = arith.divf %169, %170 : vector<8x128xf32>
    %172 = arith.mulf %163, %146 : vector<8x128xf32>
    %173 = arith.mulf %157, %165 : vector<8x128xf32>
    %174 = arith.addf %172, %173 : vector<8x128xf32>
    %175 = math.tanh %174 : vector<8x128xf32>
    %176 = arith.mulf %171, %175 : vector<8x128xf32>
    %177 = vector.extract_strided_slice %6 {offsets = [48, 0], sizes = [8, 512], strides = [1, 1]} : vector<64x512xf32> to vector<8x512xf32>
    %cst_33 = arith.constant dense<0.000000e+00> : vector<8x512xf32>
    %178 = tpu.matmul %176, %1, %cst_33 {dimension_numbers = #tpu.dot_dimension_numbers<[1], [0], [0], [1], [0, 0, 1, 1], [], []>} : vector<8x128xf32>, vector<128x512xf32>, vector<8x512xf32> -> vector<8x512xf32>
    %179 = arith.addf %177, %178 : vector<8x512xf32>
    %180 = vector.extract_strided_slice %179 {offsets = [0, 0], sizes = [8, 128], strides = [1, 1]} : vector<8x512xf32> to vector<8x128xf32>
    %181 = arith.negf %180 : vector<8x128xf32>
    %182 = math.exp %181 : vector<8x128xf32>
    %cst_34 = arith.constant 1.000000e+00 : f32
    %183 = vector.broadcast %cst_34 : f32 to vector<8x128xf32>
    %184 = arith.addf %183, %182 : vector<8x128xf32>
    %185 = arith.divf %183, %184 : vector<8x128xf32>
    %186 = vector.extract_strided_slice %179 {offsets = [0, 128], sizes = [8, 128], strides = [1, 1]} : vector<8x512xf32> to vector<8x128xf32>
    %187 = arith.negf %186 : vector<8x128xf32>
    %188 = math.exp %187 : vector<8x128xf32>
    %cst_35 = arith.constant 1.000000e+00 : f32
    %189 = vector.broadcast %cst_35 : f32 to vector<8x128xf32>
    %190 = arith.addf %189, %188 : vector<8x128xf32>
    %191 = arith.divf %189, %190 : vector<8x128xf32>
    %192 = vector.extract_strided_slice %179 {offsets = [0, 256], sizes = [8, 128], strides = [1, 1]} : vector<8x512xf32> to vector<8x128xf32>
    %193 = math.tanh %192 : vector<8x128xf32>
    %194 = vector.extract_strided_slice %179 {offsets = [0, 384], sizes = [8, 128], strides = [1, 1]} : vector<8x512xf32> to vector<8x128xf32>
    %195 = arith.negf %194 : vector<8x128xf32>
    %196 = math.exp %195 : vector<8x128xf32>
    %cst_36 = arith.constant 1.000000e+00 : f32
    %197 = vector.broadcast %cst_36 : f32 to vector<8x128xf32>
    %198 = arith.addf %197, %196 : vector<8x128xf32>
    %199 = arith.divf %197, %198 : vector<8x128xf32>
    %200 = arith.mulf %191, %174 : vector<8x128xf32>
    %201 = arith.mulf %185, %193 : vector<8x128xf32>
    %202 = arith.addf %200, %201 : vector<8x128xf32>
    %203 = math.tanh %202 : vector<8x128xf32>
    %204 = arith.mulf %199, %203 : vector<8x128xf32>
    %205 = vector.extract_strided_slice %6 {offsets = [56, 0], sizes = [8, 512], strides = [1, 1]} : vector<64x512xf32> to vector<8x512xf32>
    %cst_37 = arith.constant dense<0.000000e+00> : vector<8x512xf32>
    %206 = tpu.matmul %204, %1, %cst_37 {dimension_numbers = #tpu.dot_dimension_numbers<[1], [0], [0], [1], [0, 0, 1, 1], [], []>} : vector<8x128xf32>, vector<128x512xf32>, vector<8x512xf32> -> vector<8x512xf32>
    %207 = arith.addf %205, %206 : vector<8x512xf32>
    %208 = vector.extract_strided_slice %207 {offsets = [0, 0], sizes = [8, 128], strides = [1, 1]} : vector<8x512xf32> to vector<8x128xf32>
    %209 = arith.negf %208 : vector<8x128xf32>
    %210 = math.exp %209 : vector<8x128xf32>
    %cst_38 = arith.constant 1.000000e+00 : f32
    %211 = vector.broadcast %cst_38 : f32 to vector<8x128xf32>
    %212 = arith.addf %211, %210 : vector<8x128xf32>
    %213 = arith.divf %211, %212 : vector<8x128xf32>
    %214 = vector.extract_strided_slice %207 {offsets = [0, 128], sizes = [8, 128], strides = [1, 1]} : vector<8x512xf32> to vector<8x128xf32>
    %215 = arith.negf %214 : vector<8x128xf32>
    %216 = math.exp %215 : vector<8x128xf32>
    %cst_39 = arith.constant 1.000000e+00 : f32
    %217 = vector.broadcast %cst_39 : f32 to vector<8x128xf32>
    %218 = arith.addf %217, %216 : vector<8x128xf32>
    %219 = arith.divf %217, %218 : vector<8x128xf32>
    %220 = vector.extract_strided_slice %207 {offsets = [0, 256], sizes = [8, 128], strides = [1, 1]} : vector<8x512xf32> to vector<8x128xf32>
    %221 = math.tanh %220 : vector<8x128xf32>
    %222 = vector.extract_strided_slice %207 {offsets = [0, 384], sizes = [8, 128], strides = [1, 1]} : vector<8x512xf32> to vector<8x128xf32>
    %223 = arith.negf %222 : vector<8x128xf32>
    %224 = math.exp %223 : vector<8x128xf32>
    %cst_40 = arith.constant 1.000000e+00 : f32
    %225 = vector.broadcast %cst_40 : f32 to vector<8x128xf32>
    %226 = arith.addf %225, %224 : vector<8x128xf32>
    %227 = arith.divf %225, %226 : vector<8x128xf32>
    %228 = arith.mulf %219, %202 : vector<8x128xf32>
    %229 = arith.mulf %213, %221 : vector<8x128xf32>
    %230 = arith.addf %228, %229 : vector<8x128xf32>
    %231 = math.tanh %230 : vector<8x128xf32>
    %232 = arith.mulf %227, %231 : vector<8x128xf32>
    %c0_41 = arith.constant 0 : index
    %c0_42 = arith.constant 0 : index
    %233 = vector.load %arg4[%c0_41, %c0_42] : memref<128x128xf32, #tpu.memory_space<vmem>>, vector<128x128xf32>
    %cst_43 = arith.constant dense<0.000000e+00> : vector<8x128xf32>
    %234 = tpu.matmul %232, %233, %cst_43 {dimension_numbers = #tpu.dot_dimension_numbers<[1], [0], [0], [1], [0, 0, 1, 1], [], []>} : vector<8x128xf32>, vector<128x128xf32>, vector<8x128xf32> -> vector<8x128xf32>
    %c0_44 = arith.constant 0 : index
    %c0_45 = arith.constant 0 : index
    %235 = vector.load %arg5[%c0_44, %c0_45] : memref<1x128xf32, #tpu.memory_space<vmem>>, vector<1x128xf32>
    %236 = vector.broadcast %235 : vector<1x128xf32> to vector<8x128xf32>
    %237 = arith.addf %234, %236 : vector<8x128xf32>
    %c0_46 = arith.constant 0 : index
    %c0_47 = arith.constant 0 : index
    %238 = vector.load %arg6[%c0_46, %c0_47] : memref<8x128xf32, #tpu.memory_space<vmem>>, vector<8x128xf32>
    tpu.vector_store %arg6[%c0_46, %c0_47], %237 {strides = array<i32>} : memref<8x128xf32, #tpu.memory_space<vmem>>, vector<8x128xf32>,
    return
  }
}

</mosaic_0001>

<llo_original>
// kernel: tpu_custom_call.1
$region0: #{tpu_custom_call.1}
  #allocation0 [shape = 'u32[]', space=smem, size = 0x4, offset = 0x4, fixed_abs, tag = 'smem constant byte address 0x4 - core index']
  #allocation1 [shape = 'u32[72,128]{1,0:T(1,128)}', space=vmem, size = 0x9000, scoped, tag = 'internal scratch']
  %s0 = inlined_call_operand.hbm [shape: f32[64,128], index: 0, kind: input, shape index: {}]
  %s1 = inlined_call_operand.hbm [shape: f32[128,512], index: 1, kind: input, shape index: {}]
  %s2 = inlined_call_operand.hbm [shape: f32[128,512], index: 2, kind: input, shape index: {}]
  %s3 = inlined_call_operand.hbm [shape: f32[1,512], index: 3, kind: input, shape index: {}]
  %s4 = inlined_call_operand.hbm [shape: f32[128,128], index: 4, kind: input, shape index: {}]
  %s5 = inlined_call_operand.vmem [shape: f32[1,128], index: 5, kind: input, shape index: {}]
  %s6 = inlined_call_operand.hbm [shape: f32[8,128], index: 6, kind: output, shape index: {}]
  %s7 = sld [smem:[#allocation0]]
  $region54: #{tpu_custom_call.1} parent=0
    _
  %s9 = ssub.s32 1, %s7
  %s10 = scalar_select 0, %s9, %s7
  $region1: #{tpu_custom_call.1} parent=0
    #allocation2 [shape = 'u8[32768]{0}', space=vmem, size = 0x8000, scoped, tag = 'input window, operand 0, single buffered']
    #allocation3 [shape = 's32[1]{0}', space=sflag, size = 0x4, scoped, tag = 'scoped memory for tpu_custom_call.1']
    #allocation4 [shape = 's32[1]{0}', space=sflag, size = 0x4, scoped, tag = 'scoped memory for tpu_custom_call.1']
    #allocation5 [shape = 'u8[262144]{0}', space=vmem, size = 0x40000, scoped, tag = 'input window, operand 1, single buffered']
    #allocation6 [shape = 's32[1]{0}', space=sflag, size = 0x4, scoped, tag = 'scoped memory for tpu_custom_call.1']
    #allocation7 [shape = 'u8[262144]{0}', space=vmem, size = 0x40000, scoped, tag = 'input window, operand 2, single buffered']
    #allocation8 [shape = 'u8[2048]{0}', space=vmem, size = 0x800, scoped, tag = 'input window, operand 3, single buffered']
    #allocation9 [shape = 's32[1]{0}', space=sflag, size = 0x4, scoped, tag = 'scoped memory for tpu_custom_call.1']
    #allocation10 [shape = 'u8[65536]{0}', space=vmem, size = 0x10000, scoped, tag = 'input window, operand 4, single buffered']
    #allocation11 [shape = 'u8[4096]{0}', space=vmem, size = 0x1000, scoped, tag = 'output window, operand 0, single buffered']
    %11 = vsyncpa [#allocation3], 0
    %12 = vsyncpa [#allocation6], 0
    %13 = vsyncpa [#allocation9], 0
    %14 = vsyncpa [#allocation4], 0
    // Predicated region
    $region2: #{tpu_custom_call.1} parent=1 // pred_check
      _
    $region3: #{tpu_custom_call.1} parent=1 // pred_check_branch
      %16 = sbr.rel (0) target = $region5
    $region4: #{tpu_custom_call.1} parent=1 // pred_region
      %18 = vsyncadd [#allocation3], 0
      %s19 = sshll.u32 %s0, 4
      %s20 = int_to_ptr.hbm [resolvable:$true] %s19
      %s21 = sshll.u32 [#allocation2], 4
      %s22 = int_to_ptr.vmem [resolvable:$true] %s21
      %27 = dma.hbm_to_vmem [thread:$0]  %s20, 1024, %s22, [#allocation3], 128, 128, 8
    $region5: #{tpu_custom_call.1} parent=1 // pred_fallthru
      _
    // Predicated region
    $region6: #{tpu_custom_call.1} parent=1 // pred_check
      _
    $region7: #{tpu_custom_call.1} parent=1 // pred_check_branch
      %29 = sbr.rel (0) target = $region9
    $region8: #{tpu_custom_call.1} parent=1 // pred_region
      %31 = vsyncadd [#allocation6], 0
      %s32 = sshll.u32 %s1, 4
      %s33 = int_to_ptr.hbm [resolvable:$true] %s32
      %s34 = sshll.u32 [#allocation5], 4
      %s35 = int_to_ptr.vmem [resolvable:$true] %s34
      %40 = dma.hbm_to_vmem [thread:$0]  %s33, 8192, %s35, [#allocation6], 512, 512, 32
    $region9: #{tpu_custom_call.1} parent=1 // pred_fallthru
      _
    // Predicated region
    $region10: #{tpu_custom_call.1} parent=1 // pred_check
      _
    $region11: #{tpu_custom_call.1} parent=1 // pred_check_branch
      %42 = sbr.rel (0) target = $region13
    $region12: #{tpu_custom_call.1} parent=1 // pred_region
      %44 = vsyncadd [#allocation6], 0
      %s45 = sshll.u32 %s2, 4
      %s46 = int_to_ptr.hbm [resolvable:$true] %s45
      %s47 = sshll.u32 [#allocation7], 4
      %s48 = int_to_ptr.vmem [resolvable:$true] %s47
      %53 = dma.hbm_to_vmem [thread:$0]  %s46, 8192, %s48, [#allocation6], 512, 512, 32
    $region13: #{tpu_custom_call.1} parent=1 // pred_fallthru
      _
    // Predicated region
    $region14: #{tpu_custom_call.1} parent=1 // pred_check
      _
    $region15: #{tpu_custom_call.1} parent=1 // pred_check_branch
      %55 = sbr.rel (0) target = $region17
    $region16: #{tpu_custom_call.1} parent=1 // pred_region
      %57 = vsyncadd [#allocation9], 0
      %s59 = sshll.u32 %s3, 4
      %s60 = int_to_ptr.hbm [resolvable:$true] %s59
      %s61 = sshll.u32 [#allocation8], 4
      %s62 = int_to_ptr.vmem [resolvable:$true] %s61
      %64 = dma.hbm_to_vmem [thread:$0]  %s60, 64, %s62, [#allocation9]
    $region17: #{tpu_custom_call.1} parent=1 // pred_fallthru
      _
    // Predicated region
    $region18: #{tpu_custom_call.1} parent=1 // pred_check
      _
    $region19: #{tpu_custom_call.1} parent=1 // pred_check_branch
      %66 = sbr.rel (0) target = $region21
    $region20: #{tpu_custom_call.1} parent=1 // pred_region
      %68 = vsyncadd [#allocation9], 0
      %s69 = sshll.u32 %s4, 4
      %s70 = int_to_ptr.hbm [resolvable:$true] %s69
      %s71 = sshll.u32 [#allocation10], 4
      %s72 = int_to_ptr.vmem [resolvable:$true] %s71
      %77 = dma.hbm_to_vmem [thread:$0]  %s70, 2048, %s72, [#allocation9], 128, 128, 8
    $region21: #{tpu_custom_call.1} parent=1 // pred_fallthru
      _
    // Predicated region
    $region22: #{tpu_custom_call.1} parent=1 // pred_check
      _
    $region23: #{tpu_custom_call.1} parent=1 // pred_check_branch
      %79 = sbr.rel (0) target = $region25
    $region24: #{tpu_custom_call.1} parent=1 // pred_region
      _
    $region25: #{tpu_custom_call.1} parent=1 // pred_fallthru
      _
    // Predicated region
    $region26: #{tpu_custom_call.1} parent=1 // pred_check
      _
    $region27: #{tpu_custom_call.1} parent=1 // pred_check_branch
      %81 = sbr.rel (0) target = $region29
    $region28: #{tpu_custom_call.1} parent=1 // pred_region
      %83 = dma.done [#allocation3], 1024
    $region29: #{tpu_custom_call.1} parent=1 // pred_fallthru
      _
    // Predicated region
    $region30: #{tpu_custom_call.1} parent=1 // pred_check
      _
    $region31: #{tpu_custom_call.1} parent=1 // pred_check_branch
      %85 = sbr.rel (0) target = $region33
    $region32: #{tpu_custom_call.1} parent=1 // pred_region
      %87 = dma.done [#allocation6], 8192
    $region33: #{tpu_custom_call.1} parent=1 // pred_fallthru
      _
    // Predicated region
    $region34: #{tpu_custom_call.1} parent=1 // pred_check
      _
    $region35: #{tpu_custom_call.1} parent=1 // pred_check_branch
      %89 = sbr.rel (0) target = $region37
    $region36: #{tpu_custom_call.1} parent=1 // pred_region
      %91 = dma.done [#allocation6], 8192
    $region37: #{tpu_custom_call.1} parent=1 // pred_fallthru
      _
    // Predicated region
    $region38: #{tpu_custom_call.1} parent=1 // pred_check
      _
    $region39: #{tpu_custom_call.1} parent=1 // pred_check_branch
      %93 = sbr.rel (0) target = $region41
    $region40: #{tpu_custom_call.1} parent=1 // pred_region
      %95 = dma.done [#allocation9], 64
    $region41: #{tpu_custom_call.1} parent=1 // pred_fallthru
      _
    // Predicated region
    $region42: #{tpu_custom_call.1} parent=1 // pred_check
      _
    $region43: #{tpu_custom_call.1} parent=1 // pred_check_branch
      %97 = sbr.rel (0) target = $region45
    $region44: #{tpu_custom_call.1} parent=1 // pred_region
      %99 = dma.done [#allocation9], 2048
    $region45: #{tpu_custom_call.1} parent=1 // pred_fallthru
      _
    %v100 = vld [vmem:[#allocation5] sm:$0xff]
    %v101 = vld [vmem:[#allocation5 + $0x8] sm:$0xff]
    %v102 = vld [vmem:[#allocation5 + $0x10] sm:$0xff]
    %v103 = vld [vmem:[#allocation5 + $0x18] sm:$0xff]
    %v104 = vld [vmem:[#allocation5 + $0x20] sm:$0xff]
    %v105 = vld [vmem:[#allocation5 + $0x28] sm:$0xff]
    %v106 = vld [vmem:[#allocation5 + $0x30] sm:$0xff]
    %v107 = vld [vmem:[#allocation5 + $0x38] sm:$0xff]
    %v108 = vld [vmem:[#allocation5 + $0x40] sm:$0xff]
    %v109 = vld [vmem:[#allocation5 + $0x48] sm:$0xff]
    %v110 = vld [vmem:[#allocation5 + $0x50] sm:$0xff]
    %v111 = vld [vmem:[#allocation5 + $0x58] sm:$0xff]
    %v112 = vld [vmem:[#allocation5 + $0x60] sm:$0xff]
    %v113 = vld [vmem:[#allocation5 + $0x68] sm:$0xff]
    %v114 = vld [vmem:[#allocation5 + $0x70] sm:$0xff]
    %v115 = vld [vmem:[#allocation5 + $0x78] sm:$0xff]
    %v116 = vld [vmem:[#allocation5 + $0x80] sm:$0xff]
    %v117 = vld [vmem:[#allocation5 + $0x88] sm:$0xff]
    %v118 = vld [vmem:[#allocation5 + $0x90] sm:$0xff]
    %v119 = vld [vmem:[#allocation5 + $0x98] sm:$0xff]
    %v120 = vld [vmem:[#allocation5 + $0xa0] sm:$0xff]
    %v121 = vld [vmem:[#allocation5 + $0xa8] sm:$0xff]
    %v122 = vld [vmem:[#allocation5 + $0xb0] sm:$0xff]
    %v123 = vld [vmem:[#allocation5 + $0xb8] sm:$0xff]
    %v124 = vld [vmem:[#allocation5 + $0xc0] sm:$0xff]
    %v125 = vld [vmem:[#allocation5 + $0xc8] sm:$0xff]
    %v126 = vld [vmem:[#allocation5 + $0xd0] sm:$0xff]
    %v127 = vld [vmem:[#allocation5 + $0xd8] sm:$0xff]
    %v128 = vld [vmem:[#allocation5 + $0xe0] sm:$0xff]
    %v129 = vld [vmem:[#allocation5 + $0xe8] sm:$0xff]
    %v130 = vld [vmem:[#allocation5 + $0xf0] sm:$0xff]
    %v131 = vld [vmem:[#allocation5 + $0xf8] sm:$0xff]
    %v132 = vld [vmem:[#allocation5 + $0x100] sm:$0xff]
    %v133 = vld [vmem:[#allocation5 + $0x108] sm:$0xff]
    %v134 = vld [vmem:[#allocation5 + $0x110] sm:$0xff]
    %v135 = vld [vmem:[#allocation5 + $0x118] sm:$0xff]
    %v136 = vld [vmem:[#allocation5 + $0x120] sm:$0xff]
    %v137 = vld [vmem:[#allocation5 + $0x128] sm:$0xff]
    %v138 = vld [vmem:[#allocation5 + $0x130] sm:$0xff]
    %v139 = vld [vmem:[#allocation5 + $0x138] sm:$0xff]
    %v140 = vld [vmem:[#allocation5 + $0x140] sm:$0xff]
    %v141 = vld [vmem:[#allocation5 + $0x148] sm:$0xff]
    %v142 = vld [vmem:[#allocation5 + $0x150] sm:$0xff]
    %v143 = vld [vmem:[#allocation5 + $0x158] sm:$0xff]
    %v144 = vld [vmem:[#allocation5 + $0x160] sm:$0xff]
    %v145 = vld [vmem:[#allocation5 + $0x168] sm:$0xff]
    %v146 = vld [vmem:[#allocation5 + $0x170] sm:$0xff]
    %v147 = vld [vmem:[#allocation5 + $0x178] sm:$0xff]
    %v148 = vld [vmem:[#allocation5 + $0x180] sm:$0xff]
    %v149 = vld [vmem:[#allocation5 + $0x188] sm:$0xff]
    %v150 = vld [vmem:[#allocation5 + $0x190] sm:$0xff]
    %v151 = vld [vmem:[#allocation5 + $0x198] sm:$0xff]
    %v152 = vld [vmem:[#allocation5 + $0x1a0] sm:$0xff]
    %v153 = vld [vmem:[#allocation5 + $0x1a8] sm:$0xff]
    %v154 = vld [vmem:[#allocation5 + $0x1b0] sm:$0xff]
    %v155 = vld [vmem:[#allocation5 + $0x1b8] sm:$0xff]
    %v156 = vld [vmem:[#allocation5 + $0x1c0] sm:$0xff]
    %v157 = vld [vmem:[#allocation5 + $0x1c8] sm:$0xff]
    %v158 = vld [vmem:[#allocation5 + $0x1d0] sm:$0xff]
    %v159 = vld [vmem:[#allocation5 + $0x1d8] sm:$0xff]
    %v160 = vld [vmem:[#allocation5 + $0x1e0] sm:$0xff]
    %v161 = vld [vmem:[#allocation5 + $0x1e8] sm:$0xff]
    %v162 = vld [vmem:[#allocation5 + $0x1f0] sm:$0xff]
    %v163 = vld [vmem:[#allocation5 + $0x1f8] sm:$0xff]
    %v164 = vld [vmem:[#allocation7] sm:$0xff]
    %v165 = vld [vmem:[#allocation7 + $0x8] sm:$0xff]
    %v166 = vld [vmem:[#allocation7 + $0x10] sm:$0xff]
    %v167 = vld [vmem:[#allocation7 + $0x18] sm:$0xff]
    %v168 = vld [vmem:[#allocation7 + $0x20] sm:$0xff]
    %v169 = vld [vmem:[#allocation7 + $0x28] sm:$0xff]
    %v170 = vld [vmem:[#allocation7 + $0x30] sm:$0xff]
    %v171 = vld [vmem:[#allocation7 + $0x38] sm:$0xff]
    %v172 = vld [vmem:[#allocation7 + $0x40] sm:$0xff]
    %v173 = vld [vmem:[#allocation7 + $0x48] sm:$0xff]
    %v174 = vld [vmem:[#allocation7 + $0x50] sm:$0xff]
    %v175 = vld [vmem:[#allocation7 + $0x58] sm:$0xff]
    %v176 = vld [vmem:[#allocation7 + $0x60] sm:$0xff]
    %v177 = vld [vmem:[#allocation7 + $0x68] sm:$0xff]
    %v178 = vld [vmem:[#allocation7 + $0x70] sm:$0xff]
    %v179 = vld [vmem:[#allocation7 + $0x78] sm:$0xff]
    %v180 = vld [vmem:[#allocation7 + $0x80] sm:$0xff]
    %v181 = vld [vmem:[#allocation7 + $0x88] sm:$0xff]
    %v182 = vld [vmem:[#allocation7 + $0x90] sm:$0xff]
    %v183 = vld [vmem:[#allocation7 + $0x98] sm:$0xff]
    %v184 = vld [vmem:[#allocation7 + $0xa0] sm:$0xff]
    %v185 = vld [vmem:[#allocation7 + $0xa8] sm:$0xff]
    %v186 = vld [vmem:[#allocation7 + $0xb0] sm:$0xff]
    %v187 = vld [vmem:[#allocation7 + $0xb8] sm:$0xff]
    %v188 = vld [vmem:[#allocation7 + $0xc0] sm:$0xff]
    %v189 = vld [vmem:[#allocation7 + $0xc8] sm:$0xff]
    %v190 = vld [vmem:[#allocation7 + $0xd0] sm:$0xff]
    %v191 = vld [vmem:[#allocation7 + $0xd8] sm:$0xff]
    %v192 = vld [vmem:[#allocation7 + $0xe0] sm:$0xff]
    %v193 = vld [vmem:[#allocation7 + $0xe8] sm:$0xff]
    %v194 = vld [vmem:[#allocation7 + $0xf0] sm:$0xff]
    %v195 = vld [vmem:[#allocation7 + $0xf8] sm:$0xff]
    %v196 = vld [vmem:[#allocation7 + $0x100] sm:$0xff]
    %v197 = vld [vmem:[#allocation7 + $0x108] sm:$0xff]
    %v198 = vld [vmem:[#allocation7 + $0x110] sm:$0xff]
    %v199 = vld [vmem:[#allocation7 + $0x118] sm:$0xff]
    %v200 = vld [vmem:[#allocation7 + $0x120] sm:$0xff]
    %v201 = vld [vmem:[#allocation7 + $0x128] sm:$0xff]
    %v202 = vld [vmem:[#allocation7 + $0x130] sm:$0xff]
    %v203 = vld [vmem:[#allocation7 + $0x138] sm:$0xff]
    %v204 = vld [vmem:[#allocation7 + $0x140] sm:$0xff]
    %v205 = vld [vmem:[#allocation7 + $0x148] sm:$0xff]
    %v206 = vld [vmem:[#allocation7 + $0x150] sm:$0xff]
    %v207 = vld [vmem:[#allocation7 + $0x158] sm:$0xff]
    %v208 = vld [vmem:[#allocation7 + $0x160] sm:$0xff]
    %v209 = vld [vmem:[#allocation7 + $0x168] sm:$0xff]
    %v210 = vld [vmem:[#allocation7 + $0x170] sm:$0xff]
    %v211 = vld [vmem:[#allocation7 + $0x178] sm:$0xff]
    %v212 = vld [vmem:[#allocation7 + $0x180] sm:$0xff]
    %v213 = vld [vmem:[#allocation7 + $0x188] sm:$0xff]
    %v214 = vld [vmem:[#allocation7 + $0x190] sm:$0xff]
    %v215 = vld [vmem:[#allocation7 + $0x198] sm:$0xff]
    %v216 = vld [vmem:[#allocation7 + $0x1a0] sm:$0xff]
    %v217 = vld [vmem:[#allocation7 + $0x1a8] sm:$0xff]
    %v218 = vld [vmem:[#allocation7 + $0x1b0] sm:$0xff]
    %v219 = vld [vmem:[#allocation7 + $0x1b8] sm:$0xff]
    %v220 = vld [vmem:[#allocation7 + $0x1c0] sm:$0xff]
    %v221 = vld [vmem:[#allocation7 + $0x1c8] sm:$0xff]
    %v222 = vld [vmem:[#allocation7 + $0x1d0] sm:$0xff]
    %v223 = vld [vmem:[#allocation7 + $0x1d8] sm:$0xff]
    %v224 = vld [vmem:[#allocation7 + $0x1e0] sm:$0xff]
    %v225 = vld [vmem:[#allocation7 + $0x1e8] sm:$0xff]
    %v226 = vld [vmem:[#allocation7 + $0x1f0] sm:$0xff]
    %v227 = vld [vmem:[#allocation7 + $0x1f8] sm:$0xff]
    %v228 = vld [vmem:[#allocation8] sm:$0xf]
    %v229 = vld [vmem:[#allocation2] sm:$0xff]
    %v230 = vld [vmem:[#allocation2 + $0x8] sm:$0xff]
    %v231 = vld [vmem:[#allocation2 + $0x10] sm:$0xff]
    %v232 = vld [vmem:[#allocation2 + $0x18] sm:$0xff]
    %v233 = vld [vmem:[#allocation2 + $0x20] sm:$0xff]
    %v234 = vld [vmem:[#allocation2 + $0x28] sm:$0xff]
    %v235 = vld [vmem:[#allocation2 + $0x30] sm:$0xff]
    %v236 = vld [vmem:[#allocation2 + $0x38] sm:$0xff]
    %v238 = vperm.slane %v228, 0
    %v239 = vperm.slane %v228, 1
    %v240 = vperm.slane %v228, 2
    %v241 = vperm.slane %v228, 3
    %246 = vmatpush.msra.mxu0 %v160
    %247 = vmatpush.msra.mxu0 %v156
    %248 = vmatpush.msra.mxu0 %v152
    %249 = vmatpush.msra.mxu0 %v148
    %250 = vmatpush.msra.mxu0 %v144
    %251 = vmatpush.msra.mxu0 %v140
    %252 = vmatpush.msra.mxu0 %v136
    %253 = vmatpush.msra.mxu0 %v132
    %254 = vmatpush.msra.mxu0 %v128
    %255 = vmatpush.msra.mxu0 %v124
    %256 = vmatpush.msra.mxu0 %v120
    %257 = vmatpush.msra.mxu0 %v116
    %258 = vmatpush.msra.mxu0 %v112
    %259 = vmatpush.msra.mxu0 %v108
    %260 = vmatpush.msra.mxu0 %v104
    %261 = vmatpush.msra.mxu0 %v100
    %262 = vmatmul.f32.gmra.mxu0 %v229
    %v263 = vpop.f32.mrf.mxu0
    %v264 = vadd.f32 %v238, %v263
    %265 = vmatmul.f32.gmra.mxu0 %v230
    %v266 = vpop.f32.mrf.mxu0
    %v267 = vadd.f32 %v238, %v266
    %268 = vmatmul.f32.gmra.mxu0 %v231
    %v269 = vpop.f32.mrf.mxu0
    %v270 = vadd.f32 %v238, %v269
    %271 = vmatmul.f32.gmra.mxu0 %v232
    %v272 = vpop.f32.mrf.mxu0
    %v273 = vadd.f32 %v238, %v272
    %274 = vmatmul.f32.gmra.mxu0 %v233
    %v275 = vpop.f32.mrf.mxu0
    %v276 = vadd.f32 %v238, %v275
    %277 = vmatmul.f32.gmra.mxu0 %v234
    %v278 = vpop.f32.mrf.mxu0
    %v279 = vadd.f32 %v238, %v278
    %280 = vmatmul.f32.gmra.mxu0 %v235
    %v281 = vpop.f32.mrf.mxu0
    %v282 = vadd.f32 %v238, %v281
    %283 = vmatmul.f32.gmra.mxu0 %v236
    %v284 = vpop.f32.mrf.mxu0
    %v285 = vadd.f32 %v238, %v284
    %286 = vdwg.mxu0
    %287 = vmatpush.msra.mxu0 %v161
    %288 = vmatpush.msra.mxu0 %v157
    %289 = vmatpush.msra.mxu0 %v153
    %290 = vmatpush.msra.mxu0 %v149
    %291 = vmatpush.msra.mxu0 %v145
    %292 = vmatpush.msra.mxu0 %v141
    %293 = vmatpush.msra.mxu0 %v137
    %294 = vmatpush.msra.mxu0 %v133
    %295 = vmatpush.msra.mxu0 %v129
    %296 = vmatpush.msra.mxu0 %v125
    %297 = vmatpush.msra.mxu0 %v121
    %298 = vmatpush.msra.mxu0 %v117
    %299 = vmatpush.msra.mxu0 %v113
    %300 = vmatpush.msra.mxu0 %v109
    %301 = vmatpush.msra.mxu0 %v105
    %302 = vmatpush.msra.mxu0 %v101
    %303 = vmatmul.f32.gmra.mxu0 %v229
    %v304 = vpop.f32.mrf.mxu0
    %v305 = vadd.f32 %v239, %v304
    %306 = vmatmul.f32.gmra.mxu0 %v230
    %v307 = vpop.f32.mrf.mxu0
    %v308 = vadd.f32 %v239, %v307
    %309 = vmatmul.f32.gmra.mxu0 %v231
    %v310 = vpop.f32.mrf.mxu0
    %v311 = vadd.f32 %v239, %v310
    %312 = vmatmul.f32.gmra.mxu0 %v232
    %v313 = vpop.f32.mrf.mxu0
    %v314 = vadd.f32 %v239, %v313
    %315 = vmatmul.f32.gmra.mxu0 %v233
    %v316 = vpop.f32.mrf.mxu0
    %v317 = vadd.f32 %v239, %v316
    %318 = vmatmul.f32.gmra.mxu0 %v234
    %v319 = vpop.f32.mrf.mxu0
    %v320 = vadd.f32 %v239, %v319
    %321 = vmatmul.f32.gmra.mxu0 %v235
    %v322 = vpop.f32.mrf.mxu0
    %v323 = vadd.f32 %v239, %v322
    %324 = vmatmul.f32.gmra.mxu0 %v236
    %v325 = vpop.f32.mrf.mxu0
    %v326 = vadd.f32 %v239, %v325
    %327 = vdwg.mxu0
    %328 = vmatpush.msra.mxu0 %v162
    %329 = vmatpush.msra.mxu0 %v158
    %330 = vmatpush.msra.mxu0 %v154
    %331 = vmatpush.msra.mxu0 %v150
    %332 = vmatpush.msra.mxu0 %v146
    %333 = vmatpush.msra.mxu0 %v142
    %334 = vmatpush.msra.mxu0 %v138
    %335 = vmatpush.msra.mxu0 %v134
    %336 = vmatpush.msra.mxu0 %v130
    %337 = vmatpush.msra.mxu0 %v126
    %338 = vmatpush.msra.mxu0 %v122
    %339 = vmatpush.msra.mxu0 %v118
    %340 = vmatpush.msra.mxu0 %v114
    %341 = vmatpush.msra.mxu0 %v110
    %342 = vmatpush.msra.mxu0 %v106
    %343 = vmatpush.msra.mxu0 %v102
    %344 = vmatmul.f32.gmra.mxu0 %v229
    %v345 = vpop.f32.mrf.mxu0
    %v346 = vadd.f32 %v240, %v345
    %347 = vmatmul.f32.gmra.mxu0 %v230
    %v348 = vpop.f32.mrf.mxu0
    %v349 = vadd.f32 %v240, %v348
    %350 = vmatmul.f32.gmra.mxu0 %v231
    %v351 = vpop.f32.mrf.mxu0
    %v352 = vadd.f32 %v240, %v351
    %353 = vmatmul.f32.gmra.mxu0 %v232
    %v354 = vpop.f32.mrf.mxu0
    %v355 = vadd.f32 %v240, %v354
    %356 = vmatmul.f32.gmra.mxu0 %v233
    %v357 = vpop.f32.mrf.mxu0
    %v358 = vadd.f32 %v240, %v357
    %359 = vmatmul.f32.gmra.mxu0 %v234
    %v360 = vpop.f32.mrf.mxu0
    %v361 = vadd.f32 %v240, %v360
    %362 = vmatmul.f32.gmra.mxu0 %v235
    %v363 = vpop.f32.mrf.mxu0
    %v364 = vadd.f32 %v240, %v363
    %365 = vmatmul.f32.gmra.mxu0 %v236
    %v366 = vpop.f32.mrf.mxu0
    %v367 = vadd.f32 %v240, %v366
    %368 = vdwg.mxu0
    %369 = vmatpush.msra.mxu0 %v163
    %370 = vmatpush.msra.mxu0 %v159
    %371 = vmatpush.msra.mxu0 %v155
    %372 = vmatpush.msra.mxu0 %v151
    %373 = vmatpush.msra.mxu0 %v147
    %374 = vmatpush.msra.mxu0 %v143
    %375 = vmatpush.msra.mxu0 %v139
    %376 = vmatpush.msra.mxu0 %v135
    %377 = vmatpush.msra.mxu0 %v131
    %378 = vmatpush.msra.mxu0 %v127
    %379 = vmatpush.msra.mxu0 %v123
    %380 = vmatpush.msra.mxu0 %v119
    %381 = vmatpush.msra.mxu0 %v115
    %382 = vmatpush.msra.mxu0 %v111
    %383 = vmatpush.msra.mxu0 %v107
    %384 = vmatpush.msra.mxu0 %v103
    %385 = vmatmul.f32.gmra.mxu0 %v229
    %v386 = vpop.f32.mrf.mxu0
    %v387 = vadd.f32 %v241, %v386
    %388 = vmatmul.f32.gmra.mxu0 %v230
    %v389 = vpop.f32.mrf.mxu0
    %v390 = vadd.f32 %v241, %v389
    %391 = vmatmul.f32.gmra.mxu0 %v231
    %v392 = vpop.f32.mrf.mxu0
    %v393 = vadd.f32 %v241, %v392
    %394 = vmatmul.f32.gmra.mxu0 %v232
    %v395 = vpop.f32.mrf.mxu0
    %v396 = vadd.f32 %v241, %v395
    %397 = vmatmul.f32.gmra.mxu0 %v233
    %v398 = vpop.f32.mrf.mxu0
    %v399 = vadd.f32 %v241, %v398
    %400 = vmatmul.f32.gmra.mxu0 %v234
    %v401 = vpop.f32.mrf.mxu0
    %v402 = vadd.f32 %v241, %v401
    %403 = vmatmul.f32.gmra.mxu0 %v235
    %v404 = vpop.f32.mrf.mxu0
    %v405 = vadd.f32 %v241, %v404
    %406 = vmatmul.f32.gmra.mxu0 %v236
    %v407 = vpop.f32.mrf.mxu0
    %v408 = vadd.f32 %v241, %v407
    %409 = vdwg.mxu0
    %410 = vmatpush.msra.mxu0 %v224
    %411 = vmatpush.msra.mxu0 %v220
    %412 = vmatpush.msra.mxu0 %v216
    %413 = vmatpush.msra.mxu0 %v212
    %414 = vmatpush.msra.mxu0 %v208
    %415 = vmatpush.msra.mxu0 %v204
    %416 = vmatpush.msra.mxu0 %v200
    %417 = vmatpush.msra.mxu0 %v196
    %418 = vmatpush.msra.mxu0 %v192
    %419 = vmatpush.msra.mxu0 %v188
    %420 = vmatpush.msra.mxu0 %v184
    %421 = vmatpush.msra.mxu0 %v180
    %422 = vmatpush.msra.mxu0 %v176
    %423 = vmatpush.msra.mxu0 %v172
    %424 = vmatpush.msra.mxu0 %v168
    %425 = vmatpush.msra.mxu0 %v164
    %426 = vmatmul.f32.gmra.mxu0 0.0
    %v427 = vpop.f32.mrf.mxu0
    %v428 = vadd.f32 0.0, %v427
    %429 = vdwg.mxu0
    %430 = vmatpush.msra.mxu0 %v225
    %431 = vmatpush.msra.mxu0 %v221
    %432 = vmatpush.msra.mxu0 %v217
    %433 = vmatpush.msra.mxu0 %v213
    %434 = vmatpush.msra.mxu0 %v209
    %435 = vmatpush.msra.mxu0 %v205
    %436 = vmatpush.msra.mxu0 %v201
    %437 = vmatpush.msra.mxu0 %v197
    %438 = vmatpush.msra.mxu0 %v193
    %439 = vmatpush.msra.mxu0 %v189
    %440 = vmatpush.msra.mxu0 %v185
    %441 = vmatpush.msra.mxu0 %v181
    %442 = vmatpush.msra.mxu0 %v177
    %443 = vmatpush.msra.mxu0 %v173
    %444 = vmatpush.msra.mxu0 %v169
    %445 = vmatpush.msra.mxu0 %v165
    %446 = vmatmul.f32.gmra.mxu0 0.0
    %v447 = vpop.f32.mrf.mxu0
    %v448 = vadd.f32 0.0, %v447
    %449 = vdwg.mxu0
    %450 = vmatpush.msra.mxu0 %v226
    %451 = vmatpush.msra.mxu0 %v222
    %452 = vmatpush.msra.mxu0 %v218
    %453 = vmatpush.msra.mxu0 %v214
    %454 = vmatpush.msra.mxu0 %v210
    %455 = vmatpush.msra.mxu0 %v206
    %456 = vmatpush.msra.mxu0 %v202
    %457 = vmatpush.msra.mxu0 %v198
    %458 = vmatpush.msra.mxu0 %v194
    %459 = vmatpush.msra.mxu0 %v190
    %460 = vmatpush.msra.mxu0 %v186
    %461 = vmatpush.msra.mxu0 %v182
    %462 = vmatpush.msra.mxu0 %v178
    %463 = vmatpush.msra.mxu0 %v174
    %464 = vmatpush.msra.mxu0 %v170
    %465 = vmatpush.msra.mxu0 %v166
    %466 = vmatmul.f32.gmra.mxu0 0.0
    %v467 = vpop.f32.mrf.mxu0
    %v468 = vadd.f32 0.0, %v467
    %469 = vdwg.mxu0
    %470 = vmatpush.msra.mxu0 %v227
    %471 = vmatpush.msra.mxu0 %v223
    %472 = vmatpush.msra.mxu0 %v219
    %473 = vmatpush.msra.mxu0 %v215
    %474 = vmatpush.msra.mxu0 %v211
    %475 = vmatpush.msra.mxu0 %v207
    %476 = vmatpush.msra.mxu0 %v203
    %477 = vmatpush.msra.mxu0 %v199
    %478 = vmatpush.msra.mxu0 %v195
    %479 = vmatpush.msra.mxu0 %v191
    %480 = vmatpush.msra.mxu0 %v187
    %481 = vmatpush.msra.mxu0 %v183
    %482 = vmatpush.msra.mxu0 %v179
    %483 = vmatpush.msra.mxu0 %v175
    %484 = vmatpush.msra.mxu0 %v171
    %485 = vmatpush.msra.mxu0 %v167
    %486 = vmatmul.f32.gmra.mxu0 0.0
    %v487 = vpop.f32.mrf.mxu0
    %v488 = vadd.f32 0.0, %v487
    %489 = vdwg.mxu0
    %v490 = vadd.f32 %v264, %v428
    %v491 = vadd.f32 %v305, %v448
    %v492 = vadd.f32 %v346, %v468
    %v493 = vadd.f32 %v387, %v488
    %v494 = vxor.u32 %v490, 2147483648
    %v495 = vmul.f32 %v494, 1.442695
    %v496 = vpow.pop %v495
    %v497 = vadd.f32 %v496, 1.0
    %v498 = vrcp.pop %v497
    %v499 = vmul.f32 %v497, %v498
    %v500 = vsub.f32 1.0, %v499
    %v501 = vmul.f32 %v498, %v500
    %v502 = vadd.f32 %v498, %v501
    %vm503 = vweird.f32 %v497
    %vm504 = vweird.f32 %v498
    %vm505 = vmor %vm503, %vm504
    %v506 = vsel %vm505, %v498, %v502
    %v507 = vand.u32 2147483647, %v497
    %vm508 = vcmp.eq.f32.partialorder %v507, 8.507059e+37
    %v509 = vand.u32 %v497, 2147483648
    %v510 = vor.u32 1.1754944e-38, %v509
    %v511 = vsel %vm508, %v510, %v506
    %v512 = vmul.f32 1.0, %v511
    %v513 = vxor.u32 %v491, 2147483648
    %v514 = vmul.f32 %v513, 1.442695
    %v515 = vpow.pop %v514
    %v516 = vadd.f32 %v515, 1.0
    %v517 = vrcp.pop %v516
    %v518 = vmul.f32 %v516, %v517
    %v519 = vsub.f32 1.0, %v518
    %v520 = vmul.f32 %v517, %v519
    %v521 = vadd.f32 %v517, %v520
    %vm522 = vweird.f32 %v516
    %vm523 = vweird.f32 %v517
    %vm524 = vmor %vm522, %vm523
    %v525 = vsel %vm524, %v517, %v521
    %v526 = vand.u32 2147483647, %v516
    %vm527 = vcmp.eq.f32.partialorder %v526, 8.507059e+37
    %v528 = vand.u32 %v516, 2147483648
    %v529 = vor.u32 1.1754944e-38, %v528
    %v530 = vsel %vm527, %v529, %v525
    %v531 = vmul.f32 1.0, %v530
    %v532 = vtanh.pop %v492
    %v533 = vxor.u32 %v493, 2147483648
    %v534 = vmul.f32 %v533, 1.442695
    %v535 = vpow.pop %v534
    %v536 = vadd.f32 %v535, 1.0
    %v537 = vrcp.pop %v536
    %v538 = vmul.f32 %v536, %v537
    %v539 = vsub.f32 1.0, %v538
    %v540 = vmul.f32 %v537, %v539
    %v541 = vadd.f32 %v537, %v540
    %vm542 = vweird.f32 %v536
    %vm543 = vweird.f32 %v537
    %vm544 = vmor %vm542, %vm543
    %v545 = vsel %vm544, %v537, %v541
    %v546 = vand.u32 2147483647, %v536
    %vm547 = vcmp.eq.f32.partialorder %v546, 8.507059e+37
    %v548 = vand.u32 %v536, 2147483648
    %v549 = vor.u32 1.1754944e-38, %v548
    %v550 = vsel %vm547, %v549, %v545
    %v551 = vmul.f32 1.0, %v550
    %v552 = vmul.f32 %v531, 0.0
    %v553 = vmul.f32 %v512, %v532
    %v554 = vadd.f32 %v552, %v553
    %v555 = vtanh.pop %v554
    %v556 = vmul.f32 %v551, %v555
    %557 = vmatpush.msra.mxu0 %v224
    %558 = vmatpush.msra.mxu0 %v220
    %559 = vmatpush.msra.mxu0 %v216
    %560 = vmatpush.msra.mxu0 %v212
    %561 = vmatpush.msra.mxu0 %v208
    %562 = vmatpush.msra.mxu0 %v204
    %563 = vmatpush.msra.mxu0 %v200
    %564 = vmatpush.msra.mxu0 %v196
    %565 = vmatpush.msra.mxu0 %v192
    %566 = vmatpush.msra.mxu0 %v188
    %567 = vmatpush.msra.mxu0 %v184
    %568 = vmatpush.msra.mxu0 %v180
    %569 = vmatpush.msra.mxu0 %v176
    %570 = vmatpush.msra.mxu0 %v172
    %571 = vmatpush.msra.mxu0 %v168
    %572 = vmatpush.msra.mxu0 %v164
    %573 = vmatmul.f32.gmra.mxu0 %v556
    %v574 = vpop.f32.mrf.mxu0
    %v575 = vadd.f32 0.0, %v574
    %576 = vdwg.mxu0
    %577 = vmatpush.msra.mxu0 %v225
    %578 = vmatpush.msra.mxu0 %v221
    %579 = vmatpush.msra.mxu0 %v217
    %580 = vmatpush.msra.mxu0 %v213
    %581 = vmatpush.msra.mxu0 %v209
    %582 = vmatpush.msra.mxu0 %v205
    %583 = vmatpush.msra.mxu0 %v201
    %584 = vmatpush.msra.mxu0 %v197
    %585 = vmatpush.msra.mxu0 %v193
    %586 = vmatpush.msra.mxu0 %v189
    %587 = vmatpush.msra.mxu0 %v185
    %588 = vmatpush.msra.mxu0 %v181
    %589 = vmatpush.msra.mxu0 %v177
    %590 = vmatpush.msra.mxu0 %v173
    %591 = vmatpush.msra.mxu0 %v169
    %592 = vmatpush.msra.mxu0 %v165
    %593 = vmatmul.f32.gmra.mxu0 %v556
    %v594 = vpop.f32.mrf.mxu0
    %v595 = vadd.f32 0.0, %v594
    %596 = vdwg.mxu0
    %597 = vmatpush.msra.mxu0 %v226
    %598 = vmatpush.msra.mxu0 %v222
    %599 = vmatpush.msra.mxu0 %v218
    %600 = vmatpush.msra.mxu0 %v214
    %601 = vmatpush.msra.mxu0 %v210
    %602 = vmatpush.msra.mxu0 %v206
    %603 = vmatpush.msra.mxu0 %v202
    %604 = vmatpush.msra.mxu0 %v198
    %605 = vmatpush.msra.mxu0 %v194
    %606 = vmatpush.msra.mxu0 %v190
    %607 = vmatpush.msra.mxu0 %v186
    %608 = vmatpush.msra.mxu0 %v182
    %609 = vmatpush.msra.mxu0 %v178
    %610 = vmatpush.msra.mxu0 %v174
    %611 = vmatpush.msra.mxu0 %v170
    %612 = vmatpush.msra.mxu0 %v166
    %613 = vmatmul.f32.gmra.mxu0 %v556
    %v614 = vpop.f32.mrf.mxu0
    %v615 = vadd.f32 0.0, %v614
    %616 = vdwg.mxu0
    %617 = vmatpush.msra.mxu0 %v227
    %618 = vmatpush.msra.mxu0 %v223
    %619 = vmatpush.msra.mxu0 %v219
    %620 = vmatpush.msra.mxu0 %v215
    %621 = vmatpush.msra.mxu0 %v211
    %622 = vmatpush.msra.mxu0 %v207
    %623 = vmatpush.msra.mxu0 %v203
    %624 = vmatpush.msra.mxu0 %v199
    %625 = vmatpush.msra.mxu0 %v195
    %626 = vmatpush.msra.mxu0 %v191
    %627 = vmatpush.msra.mxu0 %v187
    %628 = vmatpush.msra.mxu0 %v183
    %629 = vmatpush.msra.mxu0 %v179
    %630 = vmatpush.msra.mxu0 %v175
    %631 = vmatpush.msra.mxu0 %v171
    %632 = vmatpush.msra.mxu0 %v167
    %633 = vmatmul.f32.gmra.mxu0 %v556
    %v634 = vpop.f32.mrf.mxu0
    %v635 = vadd.f32 0.0, %v634
    %636 = vdwg.mxu0
    %v637 = vadd.f32 %v267, %v575
    %v638 = vadd.f32 %v308, %v595
    %v639 = vadd.f32 %v349, %v615
    %v640 = vadd.f32 %v390, %v635
    %v641 = vxor.u32 %v637, 2147483648
    %v642 = vmul.f32 %v641, 1.442695
    %v643 = vpow.pop %v642
    %v644 = vadd.f32 %v643, 1.0
    %v645 = vrcp.pop %v644
    %v646 = vmul.f32 %v644, %v645
    %v647 = vsub.f32 1.0, %v646
    %v648 = vmul.f32 %v645, %v647
    %v649 = vadd.f32 %v645, %v648
    %vm650 = vweird.f32 %v644
    %vm651 = vweird.f32 %v645
    %vm652 = vmor %vm650, %vm651
    %v653 = vsel %vm652, %v645, %v649
    %v654 = vand.u32 2147483647, %v644
    %vm655 = vcmp.eq.f32.partialorder %v654, 8.507059e+37
    %v656 = vand.u32 %v644, 2147483648
    %v657 = vor.u32 1.1754944e-38, %v656
    %v658 = vsel %vm655, %v657, %v653
    %v659 = vmul.f32 1.0, %v658
    %v660 = vxor.u32 %v638, 2147483648
    %v661 = vmul.f32 %v660, 1.442695
    %v662 = vpow.pop %v661
    %v663 = vadd.f32 %v662, 1.0
    %v664 = vrcp.pop %v663
    %v665 = vmul.f32 %v663, %v664
    %v666 = vsub.f32 1.0, %v665
    %v667 = vmul.f32 %v664, %v666
    %v668 = vadd.f32 %v664, %v667
    %vm669 = vweird.f32 %v663
    %vm670 = vweird.f32 %v664
    %vm671 = vmor %vm669, %vm670
    %v672 = vsel %vm671, %v664, %v668
    %v673 = vand.u32 2147483647, %v663
    %vm674 = vcmp.eq.f32.partialorder %v673, 8.507059e+37
    %v675 = vand.u32 %v663, 2147483648
    %v676 = vor.u32 1.1754944e-38, %v675
    %v677 = vsel %vm674, %v676, %v672
    %v678 = vmul.f32 1.0, %v677
    %v679 = vtanh.pop %v639
    %v680 = vxor.u32 %v640, 2147483648
    %v681 = vmul.f32 %v680, 1.442695
    %v682 = vpow.pop %v681
    %v683 = vadd.f32 %v682, 1.0
    %v684 = vrcp.pop %v683
    %v685 = vmul.f32 %v683, %v684
    %v686 = vsub.f32 1.0, %v685
    %v687 = vmul.f32 %v684, %v686
    %v688 = vadd.f32 %v684, %v687
    %vm689 = vweird.f32 %v683
    %vm690 = vweird.f32 %v684
    %vm691 = vmor %vm689, %vm690
    %v692 = vsel %vm691, %v684, %v688
    %v693 = vand.u32 2147483647, %v683
    %vm694 = vcmp.eq.f32.partialorder %v693, 8.507059e+37
    %v695 = vand.u32 %v683, 2147483648
    %v696 = vor.u32 1.1754944e-38, %v695
    %v697 = vsel %vm694, %v696, %v692
    %v698 = vmul.f32 1.0, %v697
    %v699 = vmul.f32 %v678, %v554
    %v700 = vmul.f32 %v659, %v679
    %v701 = vadd.f32 %v699, %v700
    %v702 = vtanh.pop %v701
    %v703 = vmul.f32 %v698, %v702
    %704 = vmatpush.msra.mxu0 %v224
    %705 = vmatpush.msra.mxu0 %v220
    %706 = vmatpush.msra.mxu0 %v216
    %707 = vmatpush.msra.mxu0 %v212
    %708 = vmatpush.msra.mxu0 %v208
    %709 = vmatpush.msra.mxu0 %v204
    %710 = vmatpush.msra.mxu0 %v200
    %711 = vmatpush.msra.mxu0 %v196
    %712 = vmatpush.msra.mxu0 %v192
    %713 = vmatpush.msra.mxu0 %v188
    %714 = vmatpush.msra.mxu0 %v184
    %715 = vmatpush.msra.mxu0 %v180
    %716 = vmatpush.msra.mxu0 %v176
    %717 = vmatpush.msra.mxu0 %v172
    %718 = vmatpush.msra.mxu0 %v168
    %719 = vmatpush.msra.mxu0 %v164
    %720 = vmatmul.f32.gmra.mxu0 %v703
    %v721 = vpop.f32.mrf.mxu0
    %v722 = vadd.f32 0.0, %v721
    %723 = vdwg.mxu0
    %724 = vmatpush.msra.mxu0 %v225
    %725 = vmatpush.msra.mxu0 %v221
    %726 = vmatpush.msra.mxu0 %v217
    %727 = vmatpush.msra.mxu0 %v213
    %728 = vmatpush.msra.mxu0 %v209
    %729 = vmatpush.msra.mxu0 %v205
    %730 = vmatpush.msra.mxu0 %v201
    %731 = vmatpush.msra.mxu0 %v197
    %732 = vmatpush.msra.mxu0 %v193
    %733 = vmatpush.msra.mxu0 %v189
    %734 = vmatpush.msra.mxu0 %v185
    %735 = vmatpush.msra.mxu0 %v181
    %736 = vmatpush.msra.mxu0 %v177
    %737 = vmatpush.msra.mxu0 %v173
    %738 = vmatpush.msra.mxu0 %v169
    %739 = vmatpush.msra.mxu0 %v165
    %740 = vmatmul.f32.gmra.mxu0 %v703
    %v741 = vpop.f32.mrf.mxu0
    %v742 = vadd.f32 0.0, %v741
    %743 = vdwg.mxu0
    %744 = vmatpush.msra.mxu0 %v226
    %745 = vmatpush.msra.mxu0 %v222
    %746 = vmatpush.msra.mxu0 %v218
    %747 = vmatpush.msra.mxu0 %v214
    %748 = vmatpush.msra.mxu0 %v210
    %749 = vmatpush.msra.mxu0 %v206
    %750 = vmatpush.msra.mxu0 %v202
    %751 = vmatpush.msra.mxu0 %v198
    %752 = vmatpush.msra.mxu0 %v194
    %753 = vmatpush.msra.mxu0 %v190
    %754 = vmatpush.msra.mxu0 %v186
    %755 = vmatpush.msra.mxu0 %v182
    %756 = vmatpush.msra.mxu0 %v178
    %757 = vmatpush.msra.mxu0 %v174
    %758 = vmatpush.msra.mxu0 %v170
    %759 = vmatpush.msra.mxu0 %v166
    %760 = vmatmul.f32.gmra.mxu0 %v703
    %v761 = vpop.f32.mrf.mxu0
    %v762 = vadd.f32 0.0, %v761
    %763 = vdwg.mxu0
    %764 = vmatpush.msra.mxu0 %v227
    %765 = vmatpush.msra.mxu0 %v223
    %766 = vmatpush.msra.mxu0 %v219
    %767 = vmatpush.msra.mxu0 %v215
    %768 = vmatpush.msra.mxu0 %v211
    %769 = vmatpush.msra.mxu0 %v207
    %770 = vmatpush.msra.mxu0 %v203
    %771 = vmatpush.msra.mxu0 %v199
    %772 = vmatpush.msra.mxu0 %v195
    %773 = vmatpush.msra.mxu0 %v191
    %774 = vmatpush.msra.mxu0 %v187
    %775 = vmatpush.msra.mxu0 %v183
    %776 = vmatpush.msra.mxu0 %v179
    %777 = vmatpush.msra.mxu0 %v175
    %778 = vmatpush.msra.mxu0 %v171
    %779 = vmatpush.msra.mxu0 %v167
    %780 = vmatmul.f32.gmra.mxu0 %v703
    %v781 = vpop.f32.mrf.mxu0
    %v782 = vadd.f32 0.0, %v781
    %783 = vdwg.mxu0
    %v784 = vadd.f32 %v270, %v722
    %v785 = vadd.f32 %v311, %v742
    %v786 = vadd.f32 %v352, %v762
    %v787 = vadd.f32 %v393, %v782
    %v788 = vxor.u32 %v784, 2147483648
    %v789 = vmul.f32 %v788, 1.442695
    %v790 = vpow.pop %v789
    %v791 = vadd.f32 %v790, 1.0
    %v792 = vrcp.pop %v791
    %v793 = vmul.f32 %v791, %v792
    %v794 = vsub.f32 1.0, %v793
    %v795 = vmul.f32 %v792, %v794
    %v796 = vadd.f32 %v792, %v795
    %vm797 = vweird.f32 %v791
    %vm798 = vweird.f32 %v792
    %vm799 = vmor %vm797, %vm798
    %v800 = vsel %vm799, %v792, %v796
    %v801 = vand.u32 2147483647, %v791
    %vm802 = vcmp.eq.f32.partialorder %v801, 8.507059e+37
    %v803 = vand.u32 %v791, 2147483648
    %v804 = vor.u32 1.1754944e-38, %v803
    %v805 = vsel %vm802, %v804, %v800
    %v806 = vmul.f32 1.0, %v805
    %v807 = vxor.u32 %v785, 2147483648
    %v808 = vmul.f32 %v807, 1.442695
    %v809 = vpow.pop %v808
    %v810 = vadd.f32 %v809, 1.0
    %v811 = vrcp.pop %v810
    %v812 = vmul.f32 %v810, %v811
    %v813 = vsub.f32 1.0, %v812
    %v814 = vmul.f32 %v811, %v813
    %v815 = vadd.f32 %v811, %v814
    %vm816 = vweird.f32 %v810
    %vm817 = vweird.f32 %v811
    %vm818 = vmor %vm816, %vm817
    %v819 = vsel %vm818, %v811, %v815
    %v820 = vand.u32 2147483647, %v810
    %vm821 = vcmp.eq.f32.partialorder %v820, 8.507059e+37
    %v822 = vand.u32 %v810, 2147483648
    %v823 = vor.u32 1.1754944e-38, %v822
    %v824 = vsel %vm821, %v823, %v819
    %v825 = vmul.f32 1.0, %v824
    %v826 = vtanh.pop %v786
    %v827 = vxor.u32 %v787, 2147483648
    %v828 = vmul.f32 %v827, 1.442695
    %v829 = vpow.pop %v828
    %v830 = vadd.f32 %v829, 1.0
    %v831 = vrcp.pop %v830
    %v832 = vmul.f32 %v830, %v831
    %v833 = vsub.f32 1.0, %v832
    %v834 = vmul.f32 %v831, %v833
    %v835 = vadd.f32 %v831, %v834
    %vm836 = vweird.f32 %v830
    %vm837 = vweird.f32 %v831
    %vm838 = vmor %vm836, %vm837
    %v839 = vsel %vm838, %v831, %v835
    %v840 = vand.u32 2147483647, %v830
    %vm841 = vcmp.eq.f32.partialorder %v840, 8.507059e+37
    %v842 = vand.u32 %v830, 2147483648
    %v843 = vor.u32 1.1754944e-38, %v842
    %v844 = vsel %vm841, %v843, %v839
    %v845 = vmul.f32 1.0, %v844
    %v846 = vmul.f32 %v825, %v701
    %v847 = vmul.f32 %v806, %v826
    %v848 = vadd.f32 %v846, %v847
    %v849 = vtanh.pop %v848
    %v850 = vmul.f32 %v845, %v849
    %851 = vmatpush.msra.mxu0 %v224
    %852 = vmatpush.msra.mxu0 %v220
    %853 = vmatpush.msra.mxu0 %v216
    %854 = vmatpush.msra.mxu0 %v212
    %855 = vmatpush.msra.mxu0 %v208
    %856 = vmatpush.msra.mxu0 %v204
    %857 = vmatpush.msra.mxu0 %v200
    %858 = vmatpush.msra.mxu0 %v196
    %859 = vmatpush.msra.mxu0 %v192
    %860 = vmatpush.msra.mxu0 %v188
    %861 = vmatpush.msra.mxu0 %v184
    %862 = vmatpush.msra.mxu0 %v180
    %863 = vmatpush.msra.mxu0 %v176
    %864 = vmatpush.msra.mxu0 %v172
    %865 = vmatpush.msra.mxu0 %v168
    %866 = vmatpush.msra.mxu0 %v164
    %867 = vmatmul.f32.gmra.mxu0 %v850
    %v868 = vpop.f32.mrf.mxu0
    %v869 = vadd.f32 0.0, %v868
    %870 = vdwg.mxu0
    %871 = vmatpush.msra.mxu0 %v225
    %872 = vmatpush.msra.mxu0 %v221
    %873 = vmatpush.msra.mxu0 %v217
    %874 = vmatpush.msra.mxu0 %v213
    %875 = vmatpush.msra.mxu0 %v209
    %876 = vmatpush.msra.mxu0 %v205
    %877 = vmatpush.msra.mxu0 %v201
    %878 = vmatpush.msra.mxu0 %v197
    %879 = vmatpush.msra.mxu0 %v193
    %880 = vmatpush.msra.mxu0 %v189
    %881 = vmatpush.msra.mxu0 %v185
    %882 = vmatpush.msra.mxu0 %v181
    %883 = vmatpush.msra.mxu0 %v177
    %884 = vmatpush.msra.mxu0 %v173
    %885 = vmatpush.msra.mxu0 %v169
    %886 = vmatpush.msra.mxu0 %v165
    %887 = vmatmul.f32.gmra.mxu0 %v850
    %v888 = vpop.f32.mrf.mxu0
    %v889 = vadd.f32 0.0, %v888
    %890 = vdwg.mxu0
    %891 = vmatpush.msra.mxu0 %v226
    %892 = vmatpush.msra.mxu0 %v222
    %893 = vmatpush.msra.mxu0 %v218
    %894 = vmatpush.msra.mxu0 %v214
    %895 = vmatpush.msra.mxu0 %v210
    %896 = vmatpush.msra.mxu0 %v206
    %897 = vmatpush.msra.mxu0 %v202
    %898 = vmatpush.msra.mxu0 %v198
    %899 = vmatpush.msra.mxu0 %v194
    %900 = vmatpush.msra.mxu0 %v190
    %901 = vmatpush.msra.mxu0 %v186
    %902 = vmatpush.msra.mxu0 %v182
    %903 = vmatpush.msra.mxu0 %v178
    %904 = vmatpush.msra.mxu0 %v174
    %905 = vmatpush.msra.mxu0 %v170
    %906 = vmatpush.msra.mxu0 %v166
    %907 = vmatmul.f32.gmra.mxu0 %v850
    %v908 = vpop.f32.mrf.mxu0
    %v909 = vadd.f32 0.0, %v908
    %910 = vdwg.mxu0
    %911 = vmatpush.msra.mxu0 %v227
    %912 = vmatpush.msra.mxu0 %v223
    %913 = vmatpush.msra.mxu0 %v219
    %914 = vmatpush.msra.mxu0 %v215
    %915 = vmatpush.msra.mxu0 %v211
    %916 = vmatpush.msra.mxu0 %v207
    %917 = vmatpush.msra.mxu0 %v203
    %918 = vmatpush.msra.mxu0 %v199
    %919 = vmatpush.msra.mxu0 %v195
    %920 = vmatpush.msra.mxu0 %v191
    %921 = vmatpush.msra.mxu0 %v187
    %922 = vmatpush.msra.mxu0 %v183
    %923 = vmatpush.msra.mxu0 %v179
    %924 = vmatpush.msra.mxu0 %v175
    %925 = vmatpush.msra.mxu0 %v171
    %926 = vmatpush.msra.mxu0 %v167
    %927 = vmatmul.f32.gmra.mxu0 %v850
    %v928 = vpop.f32.mrf.mxu0
    %v929 = vadd.f32 0.0, %v928
    %930 = vdwg.mxu0
    %v931 = vadd.f32 %v273, %v869
    %v932 = vadd.f32 %v314, %v889
    %v933 = vadd.f32 %v355, %v909
    %v934 = vadd.f32 %v396, %v929
    %v935 = vxor.u32 %v931, 2147483648
    %v936 = vmul.f32 %v935, 1.442695
    %v937 = vpow.pop %v936
    %v938 = vadd.f32 %v937, 1.0
    %v939 = vrcp.pop %v938
    %v940 = vmul.f32 %v938, %v939
    %v941 = vsub.f32 1.0, %v940
    %v942 = vmul.f32 %v939, %v941
    %v943 = vadd.f32 %v939, %v942
    %vm944 = vweird.f32 %v938
    %vm945 = vweird.f32 %v939
    %vm946 = vmor %vm944, %vm945
    %v947 = vsel %vm946, %v939, %v943
    %v948 = vand.u32 2147483647, %v938
    %vm949 = vcmp.eq.f32.partialorder %v948, 8.507059e+37
    %v950 = vand.u32 %v938, 2147483648
    %v951 = vor.u32 1.1754944e-38, %v950
    %v952 = vsel %vm949, %v951, %v947
    %v953 = vmul.f32 1.0, %v952
    %v954 = vxor.u32 %v932, 2147483648
    %v955 = vmul.f32 %v954, 1.442695
    %v956 = vpow.pop %v955
    %v957 = vadd.f32 %v956, 1.0
    %v958 = vrcp.pop %v957
    %v959 = vmul.f32 %v957, %v958
    %v960 = vsub.f32 1.0, %v959
    %v961 = vmul.f32 %v958, %v960
    %v962 = vadd.f32 %v958, %v961
    %vm963 = vweird.f32 %v957
    %vm964 = vweird.f32 %v958
    %vm965 = vmor %vm963, %vm964
    %v966 = vsel %vm965, %v958, %v962
    %v967 = vand.u32 2147483647, %v957
    %vm968 = vcmp.eq.f32.partialorder %v967, 8.507059e+37
    %v969 = vand.u32 %v957, 2147483648
    %v970 = vor.u32 1.1754944e-38, %v969
    %v971 = vsel %vm968, %v970, %v966
    %v972 = vmul.f32 1.0, %v971
    %v973 = vtanh.pop %v933
    %v974 = vxor.u32 %v934, 2147483648
    %v975 = vmul.f32 %v974, 1.442695
    %v976 = vpow.pop %v975
    %v977 = vadd.f32 %v976, 1.0
    %v978 = vrcp.pop %v977
    %v979 = vmul.f32 %v977, %v978
    %v980 = vsub.f32 1.0, %v979
    %v981 = vmul.f32 %v978, %v980
    %v982 = vadd.f32 %v978, %v981
    %vm983 = vweird.f32 %v977
    %vm984 = vweird.f32 %v978
    %vm985 = vmor %vm983, %vm984
    %v986 = vsel %vm985, %v978, %v982
    %v987 = vand.u32 2147483647, %v977
    %vm988 = vcmp.eq.f32.partialorder %v987, 8.507059e+37
    %v989 = vand.u32 %v977, 2147483648
    %v990 = vor.u32 1.1754944e-38, %v989
    %v991 = vsel %vm988, %v990, %v986
    %v992 = vmul.f32 1.0, %v991
    %v993 = vmul.f32 %v972, %v848
    %v994 = vmul.f32 %v953, %v973
    %v995 = vadd.f32 %v993, %v994
    %v996 = vtanh.pop %v995
    %v997 = vmul.f32 %v992, %v996
    %998 = vmatpush.msra.mxu0 %v224
    %999 = vmatpush.msra.mxu0 %v220
    %1000 = vmatpush.msra.mxu0 %v216
    %1001 = vmatpush.msra.mxu0 %v212
    %1002 = vmatpush.msra.mxu0 %v208
    %1003 = vmatpush.msra.mxu0 %v204
    %1004 = vmatpush.msra.mxu0 %v200
    %1005 = vmatpush.msra.mxu0 %v196
    %1006 = vmatpush.msra.mxu0 %v192
    %1007 = vmatpush.msra.mxu0 %v188
    %1008 = vmatpush.msra.mxu0 %v184
    %1009 = vmatpush.msra.mxu0 %v180
    %1010 = vmatpush.msra.mxu0 %v176
    %1011 = vmatpush.msra.mxu0 %v172
    %1012 = vmatpush.msra.mxu0 %v168
    %1013 = vmatpush.msra.mxu0 %v164
    %1014 = vmatmul.f32.gmra.mxu0 %v997
    %v1015 = vpop.f32.mrf.mxu0
    %v1016 = vadd.f32 0.0, %v1015
    %1017 = vdwg.mxu0
    %1018 = vmatpush.msra.mxu0 %v225
    %1019 = vmatpush.msra.mxu0 %v221
    %1020 = vmatpush.msra.mxu0 %v217
    %1021 = vmatpush.msra.mxu0 %v213
    %1022 = vmatpush.msra.mxu0 %v209
    %1023 = vmatpush.msra.mxu0 %v205
    %1024 = vmatpush.msra.mxu0 %v201
    %1025 = vmatpush.msra.mxu0 %v197
    %1026 = vmatpush.msra.mxu0 %v193
    %1027 = vmatpush.msra.mxu0 %v189
    %1028 = vmatpush.msra.mxu0 %v185
    %1029 = vmatpush.msra.mxu0 %v181
    %1030 = vmatpush.msra.mxu0 %v177
    %1031 = vmatpush.msra.mxu0 %v173
    %1032 = vmatpush.msra.mxu0 %v169
    %1033 = vmatpush.msra.mxu0 %v165
    %1034 = vmatmul.f32.gmra.mxu0 %v997
    %v1035 = vpop.f32.mrf.mxu0
    %v1036 = vadd.f32 0.0, %v1035
    %1037 = vdwg.mxu0
    %1038 = vmatpush.msra.mxu0 %v226
    %1039 = vmatpush.msra.mxu0 %v222
    %1040 = vmatpush.msra.mxu0 %v218
    %1041 = vmatpush.msra.mxu0 %v214
    %1042 = vmatpush.msra.mxu0 %v210
    %1043 = vmatpush.msra.mxu0 %v206
    %1044 = vmatpush.msra.mxu0 %v202
    %1045 = vmatpush.msra.mxu0 %v198
    %1046 = vmatpush.msra.mxu0 %v194
    %1047 = vmatpush.msra.mxu0 %v190
    %1048 = vmatpush.msra.mxu0 %v186
    %1049 = vmatpush.msra.mxu0 %v182
    %1050 = vmatpush.msra.mxu0 %v178
    %1051 = vmatpush.msra.mxu0 %v174
    %1052 = vmatpush.msra.mxu0 %v170
    %1053 = vmatpush.msra.mxu0 %v166
    %1054 = vmatmul.f32.gmra.mxu0 %v997
    %v1055 = vpop.f32.mrf.mxu0
    %v1056 = vadd.f32 0.0, %v1055
    %1057 = vdwg.mxu0
    %1058 = vmatpush.msra.mxu0 %v227
    %1059 = vmatpush.msra.mxu0 %v223
    %1060 = vmatpush.msra.mxu0 %v219
    %1061 = vmatpush.msra.mxu0 %v215
    %1062 = vmatpush.msra.mxu0 %v211
    %1063 = vmatpush.msra.mxu0 %v207
    %1064 = vmatpush.msra.mxu0 %v203
    %1065 = vmatpush.msra.mxu0 %v199
    %1066 = vmatpush.msra.mxu0 %v195
    %1067 = vmatpush.msra.mxu0 %v191
    %1068 = vmatpush.msra.mxu0 %v187
    %1069 = vmatpush.msra.mxu0 %v183
    %1070 = vmatpush.msra.mxu0 %v179
    %1071 = vmatpush.msra.mxu0 %v175
    %1072 = vmatpush.msra.mxu0 %v171
    %1073 = vmatpush.msra.mxu0 %v167
    %1074 = vmatmul.f32.gmra.mxu0 %v997
    %v1075 = vpop.f32.mrf.mxu0
    %v1076 = vadd.f32 0.0, %v1075
    %1077 = vdwg.mxu0
    %v1078 = vadd.f32 %v276, %v1016
    %v1079 = vadd.f32 %v317, %v1036
    %v1080 = vadd.f32 %v358, %v1056
    %v1081 = vadd.f32 %v399, %v1076
    %v1082 = vxor.u32 %v1078, 2147483648
    %v1083 = vmul.f32 %v1082, 1.442695
    %v1084 = vpow.pop %v1083
    %v1085 = vadd.f32 %v1084, 1.0
    %v1086 = vrcp.pop %v1085
    %v1087 = vmul.f32 %v1085, %v1086
    %v1088 = vsub.f32 1.0, %v1087
    %v1089 = vmul.f32 %v1086, %v1088
    %v1090 = vadd.f32 %v1086, %v1089
    %vm1091 = vweird.f32 %v1085
    %vm1092 = vweird.f32 %v1086
    %vm1093 = vmor %vm1091, %vm1092
    %v1094 = vsel %vm1093, %v1086, %v1090
    %v1095 = vand.u32 2147483647, %v1085
    %vm1096 = vcmp.eq.f32.partialorder %v1095, 8.507059e+37
    %v1097 = vand.u32 %v1085, 2147483648
    %v1098 = vor.u32 1.1754944e-38, %v1097
    %v1099 = vsel %vm1096, %v1098, %v1094
    %v1100 = vmul.f32 1.0, %v1099
    %v1101 = vxor.u32 %v1079, 2147483648
    %v1102 = vmul.f32 %v1101, 1.442695
    %v1103 = vpow.pop %v1102
    %v1104 = vadd.f32 %v1103, 1.0
    %v1105 = vrcp.pop %v1104
    %v1106 = vmul.f32 %v1104, %v1105
    %v1107 = vsub.f32 1.0, %v1106
    %v1108 = vmul.f32 %v1105, %v1107
    %v1109 = vadd.f32 %v1105, %v1108
    %vm1110 = vweird.f32 %v1104
    %vm1111 = vweird.f32 %v1105
    %vm1112 = vmor %vm1110, %vm1111
    %v1113 = vsel %vm1112, %v1105, %v1109
    %v1114 = vand.u32 2147483647, %v1104
    %vm1115 = vcmp.eq.f32.partialorder %v1114, 8.507059e+37
    %v1116 = vand.u32 %v1104, 2147483648
    %v1117 = vor.u32 1.1754944e-38, %v1116
    %v1118 = vsel %vm1115, %v1117, %v1113
    %v1119 = vmul.f32 1.0, %v1118
    %v1120 = vtanh.pop %v1080
    %v1121 = vxor.u32 %v1081, 2147483648
    %v1122 = vmul.f32 %v1121, 1.442695
    %v1123 = vpow.pop %v1122
    %v1124 = vadd.f32 %v1123, 1.0
    %v1125 = vrcp.pop %v1124
    %v1126 = vmul.f32 %v1124, %v1125
    %v1127 = vsub.f32 1.0, %v1126
    %v1128 = vmul.f32 %v1125, %v1127
    %v1129 = vadd.f32 %v1125, %v1128
    %vm1130 = vweird.f32 %v1124
    %vm1131 = vweird.f32 %v1125
    %vm1132 = vmor %vm1130, %vm1131
    %v1133 = vsel %vm1132, %v1125, %v1129
    %v1134 = vand.u32 2147483647, %v1124
    %vm1135 = vcmp.eq.f32.partialorder %v1134, 8.507059e+37
    %v1136 = vand.u32 %v1124, 2147483648
    %v1137 = vor.u32 1.1754944e-38, %v1136
    %v1138 = vsel %vm1135, %v1137, %v1133
    %v1139 = vmul.f32 1.0, %v1138
    %v1140 = vmul.f32 %v1119, %v995
    %v1141 = vmul.f32 %v1100, %v1120
    %v1142 = vadd.f32 %v1140, %v1141
    %v1143 = vtanh.pop %v1142
    %v1144 = vmul.f32 %v1139, %v1143
    %1145 = vmatpush.msra.mxu0 %v224
    %1146 = vmatpush.msra.mxu0 %v220
    %1147 = vmatpush.msra.mxu0 %v216
    %1148 = vmatpush.msra.mxu0 %v212
    %1149 = vmatpush.msra.mxu0 %v208
    %1150 = vmatpush.msra.mxu0 %v204
    %1151 = vmatpush.msra.mxu0 %v200
    %1152 = vmatpush.msra.mxu0 %v196
    %1153 = vmatpush.msra.mxu0 %v192
    %1154 = vmatpush.msra.mxu0 %v188
    %1155 = vmatpush.msra.mxu0 %v184
    %1156 = vmatpush.msra.mxu0 %v180
    %1157 = vmatpush.msra.mxu0 %v176
    %1158 = vmatpush.msra.mxu0 %v172
    %1159 = vmatpush.msra.mxu0 %v168
    %1160 = vmatpush.msra.mxu0 %v164
    %1161 = vmatmul.f32.gmra.mxu0 %v1144
    %v1162 = vpop.f32.mrf.mxu0
    %v1163 = vadd.f32 0.0, %v1162
    %1164 = vdwg.mxu0
    %1165 = vmatpush.msra.mxu0 %v225
    %1166 = vmatpush.msra.mxu0 %v221
    %1167 = vmatpush.msra.mxu0 %v217
    %1168 = vmatpush.msra.mxu0 %v213
    %1169 = vmatpush.msra.mxu0 %v209
    %1170 = vmatpush.msra.mxu0 %v205
    %1171 = vmatpush.msra.mxu0 %v201
    %1172 = vmatpush.msra.mxu0 %v197
    %1173 = vmatpush.msra.mxu0 %v193
    %1174 = vmatpush.msra.mxu0 %v189
    %1175 = vmatpush.msra.mxu0 %v185
    %1176 = vmatpush.msra.mxu0 %v181
    %1177 = vmatpush.msra.mxu0 %v177
    %1178 = vmatpush.msra.mxu0 %v173
    %1179 = vmatpush.msra.mxu0 %v169
    %1180 = vmatpush.msra.mxu0 %v165
    %1181 = vmatmul.f32.gmra.mxu0 %v1144
    %v1182 = vpop.f32.mrf.mxu0
    %v1183 = vadd.f32 0.0, %v1182
    %1184 = vdwg.mxu0
    %1185 = vmatpush.msra.mxu0 %v226
    %1186 = vmatpush.msra.mxu0 %v222
    %1187 = vmatpush.msra.mxu0 %v218
    %1188 = vmatpush.msra.mxu0 %v214
    %1189 = vmatpush.msra.mxu0 %v210
    %1190 = vmatpush.msra.mxu0 %v206
    %1191 = vmatpush.msra.mxu0 %v202
    %1192 = vmatpush.msra.mxu0 %v198
    %1193 = vmatpush.msra.mxu0 %v194
    %1194 = vmatpush.msra.mxu0 %v190
    %1195 = vmatpush.msra.mxu0 %v186
    %1196 = vmatpush.msra.mxu0 %v182
    %1197 = vmatpush.msra.mxu0 %v178
    %1198 = vmatpush.msra.mxu0 %v174
    %1199 = vmatpush.msra.mxu0 %v170
    %1200 = vmatpush.msra.mxu0 %v166
    %1201 = vmatmul.f32.gmra.mxu0 %v1144
    %v1202 = vpop.f32.mrf.mxu0
    %v1203 = vadd.f32 0.0, %v1202
    %1204 = vdwg.mxu0
    %1205 = vmatpush.msra.mxu0 %v227
    %1206 = vmatpush.msra.mxu0 %v223
    %1207 = vmatpush.msra.mxu0 %v219
    %1208 = vmatpush.msra.mxu0 %v215
    %1209 = vmatpush.msra.mxu0 %v211
    %1210 = vmatpush.msra.mxu0 %v207
    %1211 = vmatpush.msra.mxu0 %v203
    %1212 = vmatpush.msra.mxu0 %v199
    %1213 = vmatpush.msra.mxu0 %v195
    %1214 = vmatpush.msra.mxu0 %v191
    %1215 = vmatpush.msra.mxu0 %v187
    %1216 = vmatpush.msra.mxu0 %v183
    %1217 = vmatpush.msra.mxu0 %v179
    %1218 = vmatpush.msra.mxu0 %v175
    %1219 = vmatpush.msra.mxu0 %v171
    %1220 = vmatpush.msra.mxu0 %v167
    %1221 = vmatmul.f32.gmra.mxu0 %v1144
    %v1222 = vpop.f32.mrf.mxu0
    %v1223 = vadd.f32 0.0, %v1222
    %1224 = vdwg.mxu0
    %v1225 = vadd.f32 %v279, %v1163
    %v1226 = vadd.f32 %v320, %v1183
    %v1227 = vadd.f32 %v361, %v1203
    %v1228 = vadd.f32 %v402, %v1223
    %v1229 = vxor.u32 %v1225, 2147483648
    %v1230 = vmul.f32 %v1229, 1.442695
    %v1231 = vpow.pop %v1230
    %v1232 = vadd.f32 %v1231, 1.0
    %v1233 = vrcp.pop %v1232
    %v1234 = vmul.f32 %v1232, %v1233
    %v1235 = vsub.f32 1.0, %v1234
    %v1236 = vmul.f32 %v1233, %v1235
    %v1237 = vadd.f32 %v1233, %v1236
    %vm1238 = vweird.f32 %v1232
    %vm1239 = vweird.f32 %v1233
    %vm1240 = vmor %vm1238, %vm1239
    %v1241 = vsel %vm1240, %v1233, %v1237
    %v1242 = vand.u32 2147483647, %v1232
    %vm1243 = vcmp.eq.f32.partialorder %v1242, 8.507059e+37
    %v1244 = vand.u32 %v1232, 2147483648
    %v1245 = vor.u32 1.1754944e-38, %v1244
    %v1246 = vsel %vm1243, %v1245, %v1241
    %v1247 = vmul.f32 1.0, %v1246
    %v1248 = vxor.u32 %v1226, 2147483648
    %v1249 = vmul.f32 %v1248, 1.442695
    %v1250 = vpow.pop %v1249
    %v1251 = vadd.f32 %v1250, 1.0
    %v1252 = vrcp.pop %v1251
    %v1253 = vmul.f32 %v1251, %v1252
    %v1254 = vsub.f32 1.0, %v1253
    %v1255 = vmul.f32 %v1252, %v1254
    %v1256 = vadd.f32 %v1252, %v1255
    %vm1257 = vweird.f32 %v1251
    %vm1258 = vweird.f32 %v1252
    %vm1259 = vmor %vm1257, %vm1258
    %v1260 = vsel %vm1259, %v1252, %v1256
    %v1261 = vand.u32 2147483647, %v1251
    %vm1262 = vcmp.eq.f32.partialorder %v1261, 8.507059e+37
    %v1263 = vand.u32 %v1251, 2147483648
    %v1264 = vor.u32 1.1754944e-38, %v1263
    %v1265 = vsel %vm1262, %v1264, %v1260
    %v1266 = vmul.f32 1.0, %v1265
    %v1267 = vtanh.pop %v1227
    %v1268 = vxor.u32 %v1228, 2147483648
    %v1269 = vmul.f32 %v1268, 1.442695
    %v1270 = vpow.pop %v1269
    %v1271 = vadd.f32 %v1270, 1.0
    %v1272 = vrcp.pop %v1271
    %v1273 = vmul.f32 %v1271, %v1272
    %v1274 = vsub.f32 1.0, %v1273
    %v1275 = vmul.f32 %v1272, %v1274
    %v1276 = vadd.f32 %v1272, %v1275
    %vm1277 = vweird.f32 %v1271
    %vm1278 = vweird.f32 %v1272
    %vm1279 = vmor %vm1277, %vm1278
    %v1280 = vsel %vm1279, %v1272, %v1276
    %v1281 = vand.u32 2147483647, %v1271
    %vm1282 = vcmp.eq.f32.partialorder %v1281, 8.507059e+37
    %v1283 = vand.u32 %v1271, 2147483648
    %v1284 = vor.u32 1.1754944e-38, %v1283
    %v1285 = vsel %vm1282, %v1284, %v1280
    %v1286 = vmul.f32 1.0, %v1285
    %v1287 = vmul.f32 %v1266, %v1142
    %v1288 = vmul.f32 %v1247, %v1267
    %v1289 = vadd.f32 %v1287, %v1288
    %v1290 = vtanh.pop %v1289
    %v1291 = vmul.f32 %v1286, %v1290
    %1292 = vmatpush.msra.mxu0 %v224
    %1293 = vmatpush.msra.mxu0 %v220
    %1294 = vmatpush.msra.mxu0 %v216
    %1295 = vmatpush.msra.mxu0 %v212
    %1296 = vmatpush.msra.mxu0 %v208
    %1297 = vmatpush.msra.mxu0 %v204
    %1298 = vmatpush.msra.mxu0 %v200
    %1299 = vmatpush.msra.mxu0 %v196
    %1300 = vmatpush.msra.mxu0 %v192
    %1301 = vmatpush.msra.mxu0 %v188
    %1302 = vmatpush.msra.mxu0 %v184
    %1303 = vmatpush.msra.mxu0 %v180
    %1304 = vmatpush.msra.mxu0 %v176
    %1305 = vmatpush.msra.mxu0 %v172
    %1306 = vmatpush.msra.mxu0 %v168
    %1307 = vmatpush.msra.mxu0 %v164
    %1308 = vmatmul.f32.gmra.mxu0 %v1291
    %v1309 = vpop.f32.mrf.mxu0
    %v1310 = vadd.f32 0.0, %v1309
    %1311 = vdwg.mxu0
    %1312 = vmatpush.msra.mxu0 %v225
    %1313 = vmatpush.msra.mxu0 %v221
    %1314 = vmatpush.msra.mxu0 %v217
    %1315 = vmatpush.msra.mxu0 %v213
    %1316 = vmatpush.msra.mxu0 %v209
    %1317 = vmatpush.msra.mxu0 %v205
    %1318 = vmatpush.msra.mxu0 %v201
    %1319 = vmatpush.msra.mxu0 %v197
    %1320 = vmatpush.msra.mxu0 %v193
    %1321 = vmatpush.msra.mxu0 %v189
    %1322 = vmatpush.msra.mxu0 %v185
    %1323 = vmatpush.msra.mxu0 %v181
    %1324 = vmatpush.msra.mxu0 %v177
    %1325 = vmatpush.msra.mxu0 %v173
    %1326 = vmatpush.msra.mxu0 %v169
    %1327 = vmatpush.msra.mxu0 %v165
    %1328 = vmatmul.f32.gmra.mxu0 %v1291
    %v1329 = vpop.f32.mrf.mxu0
    %v1330 = vadd.f32 0.0, %v1329
    %1331 = vdwg.mxu0
    %1332 = vmatpush.msra.mxu0 %v226
    %1333 = vmatpush.msra.mxu0 %v222
    %1334 = vmatpush.msra.mxu0 %v218
    %1335 = vmatpush.msra.mxu0 %v214
    %1336 = vmatpush.msra.mxu0 %v210
    %1337 = vmatpush.msra.mxu0 %v206
    %1338 = vmatpush.msra.mxu0 %v202
    %1339 = vmatpush.msra.mxu0 %v198
    %1340 = vmatpush.msra.mxu0 %v194
    %1341 = vmatpush.msra.mxu0 %v190
    %1342 = vmatpush.msra.mxu0 %v186
    %1343 = vmatpush.msra.mxu0 %v182
    %1344 = vmatpush.msra.mxu0 %v178
    %1345 = vmatpush.msra.mxu0 %v174
    %1346 = vmatpush.msra.mxu0 %v170
    %1347 = vmatpush.msra.mxu0 %v166
    %1348 = vmatmul.f32.gmra.mxu0 %v1291
    %v1349 = vpop.f32.mrf.mxu0
    %v1350 = vadd.f32 0.0, %v1349
    %1351 = vdwg.mxu0
    %1352 = vmatpush.msra.mxu0 %v227
    %1353 = vmatpush.msra.mxu0 %v223
    %1354 = vmatpush.msra.mxu0 %v219
    %1355 = vmatpush.msra.mxu0 %v215
    %1356 = vmatpush.msra.mxu0 %v211
    %1357 = vmatpush.msra.mxu0 %v207
    %1358 = vmatpush.msra.mxu0 %v203
    %1359 = vmatpush.msra.mxu0 %v199
    %1360 = vmatpush.msra.mxu0 %v195
    %1361 = vmatpush.msra.mxu0 %v191
    %1362 = vmatpush.msra.mxu0 %v187
    %1363 = vmatpush.msra.mxu0 %v183
    %1364 = vmatpush.msra.mxu0 %v179
    %1365 = vmatpush.msra.mxu0 %v175
    %1366 = vmatpush.msra.mxu0 %v171
    %1367 = vmatpush.msra.mxu0 %v167
    %1368 = vmatmul.f32.gmra.mxu0 %v1291
    %v1369 = vpop.f32.mrf.mxu0
    %v1370 = vadd.f32 0.0, %v1369
    %1371 = vdwg.mxu0
    %v1372 = vadd.f32 %v282, %v1310
    %v1373 = vadd.f32 %v323, %v1330
    %v1374 = vadd.f32 %v364, %v1350
    %v1375 = vadd.f32 %v405, %v1370
    %v1376 = vxor.u32 %v1372, 2147483648
    %v1377 = vmul.f32 %v1376, 1.442695
    %v1378 = vpow.pop %v1377
    %v1379 = vadd.f32 %v1378, 1.0
    %v1380 = vrcp.pop %v1379
    %v1381 = vmul.f32 %v1379, %v1380
    %v1382 = vsub.f32 1.0, %v1381
    %v1383 = vmul.f32 %v1380, %v1382
    %v1384 = vadd.f32 %v1380, %v1383
    %vm1385 = vweird.f32 %v1379
    %vm1386 = vweird.f32 %v1380
    %vm1387 = vmor %vm1385, %vm1386
    %v1388 = vsel %vm1387, %v1380, %v1384
    %v1389 = vand.u32 2147483647, %v1379
    %vm1390 = vcmp.eq.f32.partialorder %v1389, 8.507059e+37
    %v1391 = vand.u32 %v1379, 2147483648
    %v1392 = vor.u32 1.1754944e-38, %v1391
    %v1393 = vsel %vm1390, %v1392, %v1388
    %v1394 = vmul.f32 1.0, %v1393
    %v1395 = vxor.u32 %v1373, 2147483648
    %v1396 = vmul.f32 %v1395, 1.442695
    %v1397 = vpow.pop %v1396
    %v1398 = vadd.f32 %v1397, 1.0
    %v1399 = vrcp.pop %v1398
    %v1400 = vmul.f32 %v1398, %v1399
    %v1401 = vsub.f32 1.0, %v1400
    %v1402 = vmul.f32 %v1399, %v1401
    %v1403 = vadd.f32 %v1399, %v1402
    %vm1404 = vweird.f32 %v1398
    %vm1405 = vweird.f32 %v1399
    %vm1406 = vmor %vm1404, %vm1405
    %v1407 = vsel %vm1406, %v1399, %v1403
    %v1408 = vand.u32 2147483647, %v1398
    %vm1409 = vcmp.eq.f32.partialorder %v1408, 8.507059e+37
    %v1410 = vand.u32 %v1398, 2147483648
    %v1411 = vor.u32 1.1754944e-38, %v1410
    %v1412 = vsel %vm1409, %v1411, %v1407
    %v1413 = vmul.f32 1.0, %v1412
    %v1414 = vtanh.pop %v1374
    %v1415 = vxor.u32 %v1375, 2147483648
    %v1416 = vmul.f32 %v1415, 1.442695
    %v1417 = vpow.pop %v1416
    %v1418 = vadd.f32 %v1417, 1.0
    %v1419 = vrcp.pop %v1418
    %v1420 = vmul.f32 %v1418, %v1419
    %v1421 = vsub.f32 1.0, %v1420
    %v1422 = vmul.f32 %v1419, %v1421
    %v1423 = vadd.f32 %v1419, %v1422
    %vm1424 = vweird.f32 %v1418
    %vm1425 = vweird.f32 %v1419
    %vm1426 = vmor %vm1424, %vm1425
    %v1427 = vsel %vm1426, %v1419, %v1423
    %v1428 = vand.u32 2147483647, %v1418
    %vm1429 = vcmp.eq.f32.partialorder %v1428, 8.507059e+37
    %v1430 = vand.u32 %v1418, 2147483648
    %v1431 = vor.u32 1.1754944e-38, %v1430
    %v1432 = vsel %vm1429, %v1431, %v1427
    %v1433 = vmul.f32 1.0, %v1432
    %v1434 = vmul.f32 %v1413, %v1289
    %v1435 = vmul.f32 %v1394, %v1414
    %v1436 = vadd.f32 %v1434, %v1435
    %v1437 = vtanh.pop %v1436
    %v1438 = vmul.f32 %v1433, %v1437
    %1439 = vmatpush.msra.mxu0 %v224
    %1440 = vmatpush.msra.mxu0 %v220
    %1441 = vmatpush.msra.mxu0 %v216
    %1442 = vmatpush.msra.mxu0 %v212
    %1443 = vmatpush.msra.mxu0 %v208
    %1444 = vmatpush.msra.mxu0 %v204
    %1445 = vmatpush.msra.mxu0 %v200
    %1446 = vmatpush.msra.mxu0 %v196
    %1447 = vmatpush.msra.mxu0 %v192
    %1448 = vmatpush.msra.mxu0 %v188
    %1449 = vmatpush.msra.mxu0 %v184
    %1450 = vmatpush.msra.mxu0 %v180
    %1451 = vmatpush.msra.mxu0 %v176
    %1452 = vmatpush.msra.mxu0 %v172
    %1453 = vmatpush.msra.mxu0 %v168
    %1454 = vmatpush.msra.mxu0 %v164
    %1455 = vmatmul.f32.gmra.mxu0 %v1438
    %v1456 = vpop.f32.mrf.mxu0
    %v1457 = vadd.f32 0.0, %v1456
    %1458 = vdwg.mxu0
    %1459 = vmatpush.msra.mxu0 %v225
    %1460 = vmatpush.msra.mxu0 %v221
    %1461 = vmatpush.msra.mxu0 %v217
    %1462 = vmatpush.msra.mxu0 %v213
    %1463 = vmatpush.msra.mxu0 %v209
    %1464 = vmatpush.msra.mxu0 %v205
    %1465 = vmatpush.msra.mxu0 %v201
    %1466 = vmatpush.msra.mxu0 %v197
    %1467 = vmatpush.msra.mxu0 %v193
    %1468 = vmatpush.msra.mxu0 %v189
    %1469 = vmatpush.msra.mxu0 %v185
    %1470 = vmatpush.msra.mxu0 %v181
    %1471 = vmatpush.msra.mxu0 %v177
    %1472 = vmatpush.msra.mxu0 %v173
    %1473 = vmatpush.msra.mxu0 %v169
    %1474 = vmatpush.msra.mxu0 %v165
    %1475 = vmatmul.f32.gmra.mxu0 %v1438
    %v1476 = vpop.f32.mrf.mxu0
    %v1477 = vadd.f32 0.0, %v1476
    %1478 = vdwg.mxu0
    %1479 = vmatpush.msra.mxu0 %v226
    %1480 = vmatpush.msra.mxu0 %v222
    %1481 = vmatpush.msra.mxu0 %v218
    %1482 = vmatpush.msra.mxu0 %v214
    %1483 = vmatpush.msra.mxu0 %v210
    %1484 = vmatpush.msra.mxu0 %v206
    %1485 = vmatpush.msra.mxu0 %v202
    %1486 = vmatpush.msra.mxu0 %v198
    %1487 = vmatpush.msra.mxu0 %v194
    %1488 = vmatpush.msra.mxu0 %v190
    %1489 = vmatpush.msra.mxu0 %v186
    %1490 = vmatpush.msra.mxu0 %v182
    %1491 = vmatpush.msra.mxu0 %v178
    %1492 = vmatpush.msra.mxu0 %v174
    %1493 = vmatpush.msra.mxu0 %v170
    %1494 = vmatpush.msra.mxu0 %v166
    %1495 = vmatmul.f32.gmra.mxu0 %v1438
    %v1496 = vpop.f32.mrf.mxu0
    %v1497 = vadd.f32 0.0, %v1496
    %1498 = vdwg.mxu0
    %1499 = vmatpush.msra.mxu0 %v227
    %1500 = vmatpush.msra.mxu0 %v223
    %1501 = vmatpush.msra.mxu0 %v219
    %1502 = vmatpush.msra.mxu0 %v215
    %1503 = vmatpush.msra.mxu0 %v211
    %1504 = vmatpush.msra.mxu0 %v207
    %1505 = vmatpush.msra.mxu0 %v203
    %1506 = vmatpush.msra.mxu0 %v199
    %1507 = vmatpush.msra.mxu0 %v195
    %1508 = vmatpush.msra.mxu0 %v191
    %1509 = vmatpush.msra.mxu0 %v187
    %1510 = vmatpush.msra.mxu0 %v183
    %1511 = vmatpush.msra.mxu0 %v179
    %1512 = vmatpush.msra.mxu0 %v175
    %1513 = vmatpush.msra.mxu0 %v171
    %1514 = vmatpush.msra.mxu0 %v167
    %1515 = vmatmul.f32.gmra.mxu0 %v1438
    %v1516 = vpop.f32.mrf.mxu0
    %v1517 = vadd.f32 0.0, %v1516
    %1518 = vdwg.mxu0
    %v1519 = vadd.f32 %v285, %v1457
    %v1520 = vadd.f32 %v326, %v1477
    %v1521 = vadd.f32 %v367, %v1497
    %v1522 = vadd.f32 %v408, %v1517
    %v1523 = vxor.u32 %v1519, 2147483648
    %v1524 = vmul.f32 %v1523, 1.442695
    %v1525 = vpow.pop %v1524
    %v1526 = vadd.f32 %v1525, 1.0
    %v1527 = vrcp.pop %v1526
    %v1528 = vmul.f32 %v1526, %v1527
    %v1529 = vsub.f32 1.0, %v1528
    %v1530 = vmul.f32 %v1527, %v1529
    %v1531 = vadd.f32 %v1527, %v1530
    %vm1532 = vweird.f32 %v1526
    %vm1533 = vweird.f32 %v1527
    %vm1534 = vmor %vm1532, %vm1533
    %v1535 = vsel %vm1534, %v1527, %v1531
    %v1536 = vand.u32 2147483647, %v1526
    %vm1537 = vcmp.eq.f32.partialorder %v1536, 8.507059e+37
    %v1538 = vand.u32 %v1526, 2147483648
    %v1539 = vor.u32 1.1754944e-38, %v1538
    %v1540 = vsel %vm1537, %v1539, %v1535
    %v1541 = vmul.f32 1.0, %v1540
    %v1542 = vxor.u32 %v1520, 2147483648
    %v1543 = vmul.f32 %v1542, 1.442695
    %v1544 = vpow.pop %v1543
    %v1545 = vadd.f32 %v1544, 1.0
    %v1546 = vrcp.pop %v1545
    %v1547 = vmul.f32 %v1545, %v1546
    %v1548 = vsub.f32 1.0, %v1547
    %v1549 = vmul.f32 %v1546, %v1548
    %v1550 = vadd.f32 %v1546, %v1549
    %vm1551 = vweird.f32 %v1545
    %vm1552 = vweird.f32 %v1546
    %vm1553 = vmor %vm1551, %vm1552
    %v1554 = vsel %vm1553, %v1546, %v1550
    %v1555 = vand.u32 2147483647, %v1545
    %vm1556 = vcmp.eq.f32.partialorder %v1555, 8.507059e+37
    %v1557 = vand.u32 %v1545, 2147483648
    %v1558 = vor.u32 1.1754944e-38, %v1557
    %v1559 = vsel %vm1556, %v1558, %v1554
    %v1560 = vmul.f32 1.0, %v1559
    %v1561 = vtanh.pop %v1521
    %v1562 = vxor.u32 %v1522, 2147483648
    %v1563 = vmul.f32 %v1562, 1.442695
    %v1564 = vpow.pop %v1563
    %v1565 = vadd.f32 %v1564, 1.0
    %v1566 = vrcp.pop %v1565
    %v1567 = vmul.f32 %v1565, %v1566
    %v1568 = vsub.f32 1.0, %v1567
    %v1569 = vmul.f32 %v1566, %v1568
    %v1570 = vadd.f32 %v1566, %v1569
    %vm1571 = vweird.f32 %v1565
    %vm1572 = vweird.f32 %v1566
    %vm1573 = vmor %vm1571, %vm1572
    %v1574 = vsel %vm1573, %v1566, %v1570
    %v1575 = vand.u32 2147483647, %v1565
    %vm1576 = vcmp.eq.f32.partialorder %v1575, 8.507059e+37
    %v1577 = vand.u32 %v1565, 2147483648
    %v1578 = vor.u32 1.1754944e-38, %v1577
    %v1579 = vsel %vm1576, %v1578, %v1574
    %v1580 = vmul.f32 1.0, %v1579
    %v1581 = vmul.f32 %v1560, %v1436
    %v1582 = vmul.f32 %v1541, %v1561
    %v1583 = vadd.f32 %v1581, %v1582
    %v1584 = vtanh.pop %v1583
    %v1585 = vmul.f32 %v1580, %v1584
    %v1586 = vld [vmem:[#allocation10] sm:$0xff]
    %v1587 = vld [vmem:[#allocation10 + $0x8] sm:$0xff]
    %v1588 = vld [vmem:[#allocation10 + $0x10] sm:$0xff]
    %v1589 = vld [vmem:[#allocation10 + $0x18] sm:$0xff]
    %v1590 = vld [vmem:[#allocation10 + $0x20] sm:$0xff]
    %v1591 = vld [vmem:[#allocation10 + $0x28] sm:$0xff]
    %v1592 = vld [vmem:[#allocation10 + $0x30] sm:$0xff]
    %v1593 = vld [vmem:[#allocation10 + $0x38] sm:$0xff]
    %v1594 = vld [vmem:[#allocation10 + $0x40] sm:$0xff]
    %v1595 = vld [vmem:[#allocation10 + $0x48] sm:$0xff]
    %v1596 = vld [vmem:[#allocation10 + $0x50] sm:$0xff]
    %v1597 = vld [vmem:[#allocation10 + $0x58] sm:$0xff]
    %v1598 = vld [vmem:[#allocation10 + $0x60] sm:$0xff]
    %v1599 = vld [vmem:[#allocation10 + $0x68] sm:$0xff]
    %v1600 = vld [vmem:[#allocation10 + $0x70] sm:$0xff]
    %v1601 = vld [vmem:[#allocation10 + $0x78] sm:$0xff]
    %v1602 = vld [vmem:[%s5] sm:$0x1]
    %v1604 = vperm.slane %v1602, 0
    %1606 = vmatpush.msra.mxu0 %v1601
    %1607 = vmatpush.msra.mxu0 %v1600
    %1608 = vmatpush.msra.mxu0 %v1599
    %1609 = vmatpush.msra.mxu0 %v1598
    %1610 = vmatpush.msra.mxu0 %v1597
    %1611 = vmatpush.msra.mxu0 %v1596
    %1612 = vmatpush.msra.mxu0 %v1595
    %1613 = vmatpush.msra.mxu0 %v1594
    %1614 = vmatpush.msra.mxu0 %v1593
    %1615 = vmatpush.msra.mxu0 %v1592
    %1616 = vmatpush.msra.mxu0 %v1591
    %1617 = vmatpush.msra.mxu0 %v1590
    %1618 = vmatpush.msra.mxu0 %v1589
    %1619 = vmatpush.msra.mxu0 %v1588
    %1620 = vmatpush.msra.mxu0 %v1587
    %1621 = vmatpush.msra.mxu0 %v1586
    %1622 = vmatmul.f32.gmra.mxu0 %v1585
    %v1623 = vpop.f32.mrf.mxu0
    %v1624 = vadd.f32 %v1604, %v1623
    %1625 = vdwg.mxu0
    %1626 = vst [vmem:[#allocation11] sm:$0xff] %v1624
    // Predicated region
    $region46: #{tpu_custom_call.1} parent=1 // pred_check
      _
    $region47: #{tpu_custom_call.1} parent=1 // pred_check_branch
      %1628 = sbr.rel (0) target = $region49
    $region48: #{tpu_custom_call.1} parent=1 // pred_region
      %1630 = vsyncadd [#allocation4], 0
      %s1632 = sshll.u32 [#allocation11], 4
      %s1633 = int_to_ptr.vmem [resolvable:$true] %s1632
      %s1634 = sshll.u32 %s6, 4
      %s1635 = int_to_ptr.hbm [resolvable:$true] %s1634
      %1637 = dma.vmem_to_hbm [thread:$0]  %s1633, 128, %s1635, [#allocation4]
    $region49: #{tpu_custom_call.1} parent=1 // pred_fallthru
      _
    // Predicated region
    $region50: #{tpu_custom_call.1} parent=1 // pred_check
      _
    $region51: #{tpu_custom_call.1} parent=1 // pred_check_branch
      %1639 = sbr.rel (0) target = $region53
    $region52: #{tpu_custom_call.1} parent=1 // pred_region
      %1641 = dma.done [#allocation4], 128
    $region53: #{tpu_custom_call.1} parent=1 // pred_fallthru
      _
    %1642 = vsyncpa [#allocation3], 1
    %1643 = vsyncpa [#allocation6], 1
    %1644 = vsyncpa [#allocation9], 1
    %1645 = vsyncpa [#allocation4], 1

</llo_original>
